<compile_context>
chip_gen: v7x
topology: tpu7x:2x2x1
jax: 0.10.0
libtpu: 0.0.40
codegen_flags: <defaults>
</compile_context>

<pallas_src>
import jax
import jax.numpy as jnp
from jax.experimental import pallas as pl
from jax.experimental.pallas import tpu as pltpu

H_0 = 90
H_1 = 90
H_2 = 90
H_3 = 90
FC1 = 32

HP = 128   # lane-padded hidden width (H_0..H_3 and fc1's 32 all pad to 128)
GP = 8     # sublane-padded number of graphs
SUB = 8    # sublane multiple for the node dimension


def _full_spec(shape):
    # single whole-array block (no grid) — everything here fits VMEM comfortably
    return pl.BlockSpec(shape, lambda: (0,) * len(shape))


# ---------------------------------------------------------------------------
# Fused forward kernel:
#   h1 = relu(A@x  @ Wl1 + x  @ Wr1 + b1)
#   h2 = relu(A@h1 @ Wl2 + h1 @ Wr2 + b2)
#   h3 = relu(A@h2 @ Wl3 + h2 @ Wr3 + b3)
#   out = relu(P@h3 @ Wf1 + bf1) ·row wf2 + bf2        (fc2 on VPU, not MXU)
# ---------------------------------------------------------------------------
def _fused_graphsage_kernel(a_ref, p_ref, x_ref,
                            wl1_ref, wr1_ref, b1_ref,
                            wl2_ref, wr2_ref, b2_ref,
                            wl3_ref, wr3_ref, b3_ref,
                            wf1_ref, bf1_ref, wf2_ref, bf2_ref,
                            o_ref):
    a = a_ref[...]                                  # (N, N) bf16 row-normalized adjacency

    def sage(h_bf, wl_ref, wr_ref, b_ref):
        # neighbour mean aggregation as a dense matmul, f32 accumulation
        agg = jnp.dot(a, h_bf, preferred_element_type=jnp.float32)
        # two 128-K MXU dots summed in f32 (no VMEM staging, no wide-K concat)
        out = (jnp.dot(agg.astype(jnp.bfloat16), wl_ref[...],
                       preferred_element_type=jnp.float32)
               + jnp.dot(h_bf, wr_ref[...], preferred_element_type=jnp.float32)
               + b_ref[...])
        return jnp.maximum(out, 0.0).astype(jnp.bfloat16)     # fused ReLU

    h1 = sage(x_ref[...], wl1_ref, wr1_ref, b1_ref)
    h2 = sage(h1, wl2_ref, wr2_ref, b2_ref)
    h3 = sage(h2, wl3_ref, wr3_ref, b3_ref)
    # TODO(synk): h3 == self.activations; the gradient hook (register_hook) is a
    # training-time feature with no forward/inference equivalent.

    # global mean pool (dense pooling matrix) + fc1 + ReLU
    pooled = jnp.dot(p_ref[...], h3, preferred_element_type=jnp.float32)       # (GP, HP)
    h4 = jnp.maximum(
        jnp.dot(pooled.astype(jnp.bfloat16), wf1_ref[...],
                preferred_element_type=jnp.float32) + bf1_ref[...],
        0.0)
    # fc2 (32 -> 1, zero-padded to 128 lanes): VPU multiply + lane reduction
    o_ref[...] = jnp.sum(h4 * wf2_ref[...], axis=-1, keepdims=True) + bf2_ref[...]


def graphsage_forward(params, x_pad, adj, pool_mat, num_graphs):
    wl1, wr1, b1 = params["conv1"]
    wl2, wr2, b2 = params["conv2"]
    wl3, wr3, b3 = params["conv3"]
    wf1, bf1, wf2, bf2 = params["fc"]
    args = (adj, pool_mat, x_pad,
            wl1, wr1, b1, wl2, wr2, b2, wl3, wr3, b3,
            wf1, bf1, wf2, bf2)
    out = pl.pallas_call(
        _fused_graphsage_kernel,
        out_shape=jax.ShapeDtypeStruct((GP, 1), jnp.float32),
        in_specs=[_full_spec(a.shape) for a in args],
        out_specs=_full_spec((GP, 1)),
        compiler_params=pltpu.CompilerParams(vmem_limit_bytes=64 << 20),
    )(*args)
    return out[:num_graphs]


# ---------------------------------------------------------------------------
# Glue: graph-structure operators & padding (plain JAX, host side, done once)
# ---------------------------------------------------------------------------
def _pad2(w, rows, cols):
    return jnp.zeros((rows, cols), w.dtype).at[:w.shape[0], :w.shape[1]].set(w)


def _round_up(n, m):
    return ((n + m - 1) // m) * m


def build_mean_adj(edge_index, num_nodes, num_nodes_pad):
    # A_mean[i, j] = 1/deg_in(i) for each edge j -> i; rows with no in-edges -> 0
    src, dst = edge_index[0], edge_index[1]
    a = jnp.zeros((num_nodes_pad, num_nodes_pad), jnp.float32).at[dst, src].add(1.0)
    deg = a.sum(axis=1, keepdims=True)
    return (a / jnp.maximum(deg, 1.0)).astype(jnp.bfloat16)


def build_pool_matrix(batch, num_graphs, num_nodes_pad):
    assert num_graphs <= GP, f"num_graphs={num_graphs} exceeds GP={GP}"
    onehot = (batch[None, :] == jnp.arange(num_graphs)[:, None]).astype(jnp.float32)
    counts = onehot.sum(axis=1, keepdims=True)
    p = onehot / jnp.maximum(counts, 1.0)
    p_pad = jnp.zeros((GP, num_nodes_pad), jnp.float32).at[:num_graphs, :batch.shape[0]].set(p)
    return p_pad.astype(jnp.bfloat16)


# ---------------------------------------------------------------------------
# Parameter init (deterministic, kaiming-uniform-like), padded, bf16, W_l / W_r separate
# ---------------------------------------------------------------------------
def kaiming_uniform(key, fan_in, fan_out):
    bound = (6.0 / fan_in) ** 0.5  # gain=sqrt(2), bound = gain*sqrt(3/fan_in)
    return jax.random.uniform(key, (fan_in, fan_out), jnp.float32, -bound, bound)


def init_params(key):
    ks = jax.random.split(key, 8)

    def sage_params(k_l, k_r, h_in, h_out):
        w_l = kaiming_uniform(k_l, h_in, h_out)   # neighbour path (lin_l, carries bias)
        w_r = kaiming_uniform(k_r, h_in, h_out)   # root path (lin_r, bias-free)
        wl = _pad2(w_l, HP, HP).astype(jnp.bfloat16)    # (128, 128) bf16
        wr = _pad2(w_r, HP, HP).astype(jnp.bfloat16)    # (128, 128) bf16
        b = jnp.zeros((1, HP), jnp.float32)
        return wl, wr, b

    w1 = kaiming_uniform(ks[6], H_3, FC1)
    w2 = kaiming_uniform(ks[7], FC1, 1)
    return {
        "conv1": sage_params(ks[0], ks[1], H_0, H_1),
        "conv2": sage_params(ks[2], ks[3], H_1, H_2),
        "conv3": sage_params(ks[4], ks[5], H_2, H_3),
        "fc": (_pad2(w1, HP, HP).astype(jnp.bfloat16),   # fc1 weight, (128, 128) bf16
               jnp.zeros((1, HP), jnp.float32),          # fc1 bias
               _pad2(w2.T, 1, HP),                       # fc2 weight as lane row, (1, 128) f32
               jnp.zeros((1, 1), jnp.float32)),          # fc2 bias
    }


if __name__ == "__main__":
    key = jax.random.PRNGKey(0)
    k_x, k_e, k_p = jax.random.split(key, 3)

    num_graphs = 2
    nodes_per_graph = 32
    num_nodes = num_graphs * nodes_per_graph      # 64
    num_edges = 160

    x = jax.random.normal(k_x, (num_nodes, H_0), jnp.float32)
    edge_index = jax.random.randint(k_e, (2, num_edges), 0, num_nodes, jnp.int32)
    edge_attr = jax.random.normal(key, (num_edges,), jnp.float32)  # unused by forward (as in torch)
    batch = jnp.repeat(jnp.arange(num_graphs, dtype=jnp.int32), nodes_per_graph)

    num_nodes_pad = _round_up(num_nodes, SUB)                   # sublane-aligned node count
    x_pad = _pad2(x, num_nodes_pad, HP).astype(jnp.bfloat16)    # (64, 128) bf16, lanes 90..127 zero
    adj = build_mean_adj(edge_index, num_nodes, num_nodes_pad)  # (64, 64) bf16
    pool_mat = build_pool_matrix(batch, num_graphs, num_nodes_pad)  # (8, 64) bf16

    params = init_params(k_p)

    out = graphsage_forward(params, x_pad, adj, pool_mat, num_graphs)
    out = jax.block_until_ready(out)
    assert out.shape == (num_graphs, 1)
    assert bool(jnp.all(jnp.isfinite(out)))
    print("KERNEL_OK")
</pallas_src>

<mosaic_0001>
module attributes {stable_mosaic.version = 11 : i64} {
  func.func @_fused_graphsage_kernel(%arg0: memref<64x64xbf16, #tpu.memory_space<vmem>>, %arg1: memref<8x64xbf16, #tpu.memory_space<vmem>>, %arg2: memref<64x128xbf16, #tpu.memory_space<vmem>>, %arg3: memref<128x128xbf16, #tpu.memory_space<vmem>>, %arg4: memref<128x128xbf16, #tpu.memory_space<vmem>>, %arg5: memref<1x128xf32, #tpu.memory_space<vmem>>, %arg6: memref<128x128xbf16, #tpu.memory_space<vmem>>, %arg7: memref<128x128xbf16, #tpu.memory_space<vmem>>, %arg8: memref<1x128xf32, #tpu.memory_space<vmem>>, %arg9: memref<128x128xbf16, #tpu.memory_space<vmem>>, %arg10: memref<128x128xbf16, #tpu.memory_space<vmem>>, %arg11: memref<1x128xf32, #tpu.memory_space<vmem>>, %arg12: memref<128x128xbf16, #tpu.memory_space<vmem>>, %arg13: memref<1x128xf32, #tpu.memory_space<vmem>>, %arg14: memref<1x128xf32, #tpu.memory_space<vmem>>, %arg15: memref<1x1xf32, #tpu.memory_space<vmem>>, %arg16: memref<8x1xf32, #tpu.memory_space<vmem>>) attributes {dimension_semantics = [], scalar_prefetch = 0 : i64, scratch_operands = 0 : i64, tpu.core_type = #tpu.core_type<tc>} {
    %c0 = arith.constant 0 : index
    %c0_0 = arith.constant 0 : index
    %0 = vector.load %arg0[%c0, %c0_0] : memref<64x64xbf16, #tpu.memory_space<vmem>>, vector<64x64xbf16>
    %c0_1 = arith.constant 0 : index
    %c0_2 = arith.constant 0 : index
    %1 = vector.load %arg2[%c0_1, %c0_2] : memref<64x128xbf16, #tpu.memory_space<vmem>>, vector<64x128xbf16>
    %cst = arith.constant dense<0.000000e+00> : vector<64x128xf32>
    %2 = tpu.matmul %0, %1, %cst {dimension_numbers = #tpu.dot_dimension_numbers<[1], [0], [0], [1], [0, 0, 1, 1], [], []>} : vector<64x64xbf16>, vector<64x128xbf16>, vector<64x128xf32> -> vector<64x128xf32>
    %3 = arith.truncf %2 : vector<64x128xf32> to vector<64x128xbf16>
    %c0_3 = arith.constant 0 : index
    %c0_4 = arith.constant 0 : index
    %4 = vector.load %arg3[%c0_3, %c0_4] : memref<128x128xbf16, #tpu.memory_space<vmem>>, vector<128x128xbf16>
    %cst_5 = arith.constant dense<0.000000e+00> : vector<64x128xf32>
    %5 = tpu.matmul %3, %4, %cst_5 {dimension_numbers = #tpu.dot_dimension_numbers<[1], [0], [0], [1], [0, 0, 1, 1], [], []>} : vector<64x128xbf16>, vector<128x128xbf16>, vector<64x128xf32> -> vector<64x128xf32>
    %c0_6 = arith.constant 0 : index
    %c0_7 = arith.constant 0 : index
    %6 = vector.load %arg4[%c0_6, %c0_7] : memref<128x128xbf16, #tpu.memory_space<vmem>>, vector<128x128xbf16>
    %cst_8 = arith.constant dense<0.000000e+00> : vector<64x128xf32>
    %7 = tpu.matmul %1, %6, %cst_8 {dimension_numbers = #tpu.dot_dimension_numbers<[1], [0], [0], [1], [0, 0, 1, 1], [], []>} : vector<64x128xbf16>, vector<128x128xbf16>, vector<64x128xf32> -> vector<64x128xf32>
    %8 = arith.addf %5, %7 : vector<64x128xf32>
    %c0_9 = arith.constant 0 : index
    %c0_10 = arith.constant 0 : index
    %9 = vector.load %arg5[%c0_9, %c0_10] : memref<1x128xf32, #tpu.memory_space<vmem>>, vector<1x128xf32>
    %10 = vector.broadcast %9 : vector<1x128xf32> to vector<64x128xf32>
    %11 = arith.addf %8, %10 : vector<64x128xf32>
    %cst_11 = arith.constant 0.000000e+00 : f32
    %12 = vector.broadcast %cst_11 : f32 to vector<64x128xf32>
    %13 = arith.maximumf %11, %12 : vector<64x128xf32>
    %14 = arith.truncf %13 : vector<64x128xf32> to vector<64x128xbf16>
    %cst_12 = arith.constant dense<0.000000e+00> : vector<64x128xf32>
    %15 = tpu.matmul %0, %14, %cst_12 {dimension_numbers = #tpu.dot_dimension_numbers<[1], [0], [0], [1], [0, 0, 1, 1], [], []>} : vector<64x64xbf16>, vector<64x128xbf16>, vector<64x128xf32> -> vector<64x128xf32>
    %16 = arith.truncf %15 : vector<64x128xf32> to vector<64x128xbf16>
    %c0_13 = arith.constant 0 : index
    %c0_14 = arith.constant 0 : index
    %17 = vector.load %arg6[%c0_13, %c0_14] : memref<128x128xbf16, #tpu.memory_space<vmem>>, vector<128x128xbf16>
    %cst_15 = arith.constant dense<0.000000e+00> : vector<64x128xf32>
    %18 = tpu.matmul %16, %17, %cst_15 {dimension_numbers = #tpu.dot_dimension_numbers<[1], [0], [0], [1], [0, 0, 1, 1], [], []>} : vector<64x128xbf16>, vector<128x128xbf16>, vector<64x128xf32> -> vector<64x128xf32>
    %c0_16 = arith.constant 0 : index
    %c0_17 = arith.constant 0 : index
    %19 = vector.load %arg7[%c0_16, %c0_17] : memref<128x128xbf16, #tpu.memory_space<vmem>>, vector<128x128xbf16>
    %cst_18 = arith.constant dense<0.000000e+00> : vector<64x128xf32>
    %20 = tpu.matmul %14, %19, %cst_18 {dimension_numbers = #tpu.dot_dimension_numbers<[1], [0], [0], [1], [0, 0, 1, 1], [], []>} : vector<64x128xbf16>, vector<128x128xbf16>, vector<64x128xf32> -> vector<64x128xf32>
    %21 = arith.addf %18, %20 : vector<64x128xf32>
    %c0_19 = arith.constant 0 : index
    %c0_20 = arith.constant 0 : index
    %22 = vector.load %arg8[%c0_19, %c0_20] : memref<1x128xf32, #tpu.memory_space<vmem>>, vector<1x128xf32>
    %23 = vector.broadcast %22 : vector<1x128xf32> to vector<64x128xf32>
    %24 = arith.addf %21, %23 : vector<64x128xf32>
    %cst_21 = arith.constant 0.000000e+00 : f32
    %25 = vector.broadcast %cst_21 : f32 to vector<64x128xf32>
    %26 = arith.maximumf %24, %25 : vector<64x128xf32>
    %27 = arith.truncf %26 : vector<64x128xf32> to vector<64x128xbf16>
    %cst_22 = arith.constant dense<0.000000e+00> : vector<64x128xf32>
    %28 = tpu.matmul %0, %27, %cst_22 {dimension_numbers = #tpu.dot_dimension_numbers<[1], [0], [0], [1], [0, 0, 1, 1], [], []>} : vector<64x64xbf16>, vector<64x128xbf16>, vector<64x128xf32> -> vector<64x128xf32>
    %29 = arith.truncf %28 : vector<64x128xf32> to vector<64x128xbf16>
    %c0_23 = arith.constant 0 : index
    %c0_24 = arith.constant 0 : index
    %30 = vector.load %arg9[%c0_23, %c0_24] : memref<128x128xbf16, #tpu.memory_space<vmem>>, vector<128x128xbf16>
    %cst_25 = arith.constant dense<0.000000e+00> : vector<64x128xf32>
    %31 = tpu.matmul %29, %30, %cst_25 {dimension_numbers = #tpu.dot_dimension_numbers<[1], [0], [0], [1], [0, 0, 1, 1], [], []>} : vector<64x128xbf16>, vector<128x128xbf16>, vector<64x128xf32> -> vector<64x128xf32>
    %c0_26 = arith.constant 0 : index
    %c0_27 = arith.constant 0 : index
    %32 = vector.load %arg10[%c0_26, %c0_27] : memref<128x128xbf16, #tpu.memory_space<vmem>>, vector<128x128xbf16>
    %cst_28 = arith.constant dense<0.000000e+00> : vector<64x128xf32>
    %33 = tpu.matmul %27, %32, %cst_28 {dimension_numbers = #tpu.dot_dimension_numbers<[1], [0], [0], [1], [0, 0, 1, 1], [], []>} : vector<64x128xbf16>, vector<128x128xbf16>, vector<64x128xf32> -> vector<64x128xf32>
    %34 = arith.addf %31, %33 : vector<64x128xf32>
    %c0_29 = arith.constant 0 : index
    %c0_30 = arith.constant 0 : index
    %35 = vector.load %arg11[%c0_29, %c0_30] : memref<1x128xf32, #tpu.memory_space<vmem>>, vector<1x128xf32>
    %36 = vector.broadcast %35 : vector<1x128xf32> to vector<64x128xf32>
    %37 = arith.addf %34, %36 : vector<64x128xf32>
    %cst_31 = arith.constant 0.000000e+00 : f32
    %38 = vector.broadcast %cst_31 : f32 to vector<64x128xf32>
    %39 = arith.maximumf %37, %38 : vector<64x128xf32>
    %40 = arith.truncf %39 : vector<64x128xf32> to vector<64x128xbf16>
    %c0_32 = arith.constant 0 : index
    %c0_33 = arith.constant 0 : index
    %41 = vector.load %arg1[%c0_32, %c0_33] : memref<8x64xbf16, #tpu.memory_space<vmem>>, vector<8x64xbf16>
    %cst_34 = arith.constant dense<0.000000e+00> : vector<8x128xf32>
    %42 = tpu.matmul %41, %40, %cst_34 {dimension_numbers = #tpu.dot_dimension_numbers<[1], [0], [0], [1], [0, 0, 1, 1], [], []>} : vector<8x64xbf16>, vector<64x128xbf16>, vector<8x128xf32> -> vector<8x128xf32>
    %43 = arith.truncf %42 : vector<8x128xf32> to vector<8x128xbf16>
    %c0_35 = arith.constant 0 : index
    %c0_36 = arith.constant 0 : index
    %44 = vector.load %arg12[%c0_35, %c0_36] : memref<128x128xbf16, #tpu.memory_space<vmem>>, vector<128x128xbf16>
    %cst_37 = arith.constant dense<0.000000e+00> : vector<8x128xf32>
    %45 = tpu.matmul %43, %44, %cst_37 {dimension_numbers = #tpu.dot_dimension_numbers<[1], [0], [0], [1], [0, 0, 1, 1], [], []>} : vector<8x128xbf16>, vector<128x128xbf16>, vector<8x128xf32> -> vector<8x128xf32>
    %c0_38 = arith.constant 0 : index
    %c0_39 = arith.constant 0 : index
    %46 = vector.load %arg13[%c0_38, %c0_39] : memref<1x128xf32, #tpu.memory_space<vmem>>, vector<1x128xf32>
    %47 = vector.broadcast %46 : vector<1x128xf32> to vector<8x128xf32>
    %48 = arith.addf %45, %47 : vector<8x128xf32>
    %cst_40 = arith.constant 0.000000e+00 : f32
    %49 = vector.broadcast %cst_40 : f32 to vector<8x128xf32>
    %50 = arith.maximumf %48, %49 : vector<8x128xf32>
    %c0_41 = arith.constant 0 : index
    %c0_42 = arith.constant 0 : index
    %51 = vector.load %arg14[%c0_41, %c0_42] : memref<1x128xf32, #tpu.memory_space<vmem>>, vector<1x128xf32>
    %52 = vector.broadcast %51 : vector<1x128xf32> to vector<8x128xf32>
    %53 = arith.mulf %50, %52 : vector<8x128xf32>
    %cst_43 = arith.constant dense<0.000000e+00> : vector<8xf32>
    %54 = vector.multi_reduction <add>, %53, %cst_43 [1] : vector<8x128xf32> to vector<8xf32>
    %55 = vector.shape_cast %54 : vector<8xf32> to vector<8x1xf32>
    %c0_44 = arith.constant 0 : index
    %c0_45 = arith.constant 0 : index
    %56 = vector.load %arg15[%c0_44, %c0_45] : memref<1x1xf32, #tpu.memory_space<vmem>>, vector<1x1xf32>
    %57 = vector.broadcast %56 : vector<1x1xf32> to vector<8x1xf32>
    %58 = arith.addf %55, %57 : vector<8x1xf32>
    %c0_46 = arith.constant 0 : index
    %c0_47 = arith.constant 0 : index
    %59 = vector.load %arg16[%c0_46, %c0_47] : memref<8x1xf32, #tpu.memory_space<vmem>>, vector<8x1xf32>
    tpu.vector_store %arg16[%c0_46, %c0_47], %58 {strides = array<i32>} : memref<8x1xf32, #tpu.memory_space<vmem>>, vector<8x1xf32>,
    return
  }
}

</mosaic_0001>

<llo_original>
// kernel: tpu_custom_call.1
$region0: #{tpu_custom_call.1}
  #allocation0 [shape = 'u32[]', space=smem, size = 0x4, offset = 0x4, fixed_abs, tag = 'smem constant byte address 0x4 - core index']
  #allocation1 [shape = 'u32[144,128]{1,0:T(1,128)}', space=vmem, size = 0x12000, scoped, tag = 'internal scratch']
  #allocation2 [shape = 'f32[1,1]{1,0:T(1,128)S(1)}', space=vmem, size = 0x200, scoped, tag = 'scoped memory for tpu_custom_call.1']
  %s0 = inlined_call_operand.hbm [shape: bf16[64,64], index: 0, kind: input, shape index: {}]
  %s1 = inlined_call_operand.hbm [shape: bf16[8,64], index: 1, kind: input, shape index: {}]
  %s2 = inlined_call_operand.hbm [shape: bf16[64,128], index: 2, kind: input, shape index: {}]
  %s3 = inlined_call_operand.hbm [shape: bf16[128,128], index: 3, kind: input, shape index: {}]
  %s4 = inlined_call_operand.hbm [shape: bf16[128,128], index: 4, kind: input, shape index: {}]
  %s5 = inlined_call_operand.hbm [shape: f32[1,128], index: 5, kind: input, shape index: {}]
  %s6 = inlined_call_operand.hbm [shape: bf16[128,128], index: 6, kind: input, shape index: {}]
  %s7 = inlined_call_operand.hbm [shape: bf16[128,128], index: 7, kind: input, shape index: {}]
  %s8 = inlined_call_operand.hbm [shape: f32[1,128], index: 8, kind: input, shape index: {}]
  %s9 = inlined_call_operand.hbm [shape: bf16[128,128], index: 9, kind: input, shape index: {}]
  %s10 = inlined_call_operand.hbm [shape: bf16[128,128], index: 10, kind: input, shape index: {}]
  %s11 = inlined_call_operand.hbm [shape: f32[1,128], index: 11, kind: input, shape index: {}]
  %s12 = inlined_call_operand.hbm [shape: bf16[128,128], index: 12, kind: input, shape index: {}]
  %s13 = inlined_call_operand.hbm [shape: f32[1,128], index: 13, kind: input, shape index: {}]
  %s14 = inlined_call_operand.hbm [shape: f32[1,128], index: 14, kind: input, shape index: {}]
  %s15 = inlined_call_operand.<no memory space> [shape: f32[1,1], index: 15, kind: input, shape index: {}]
  %s16 = inlined_call_operand.hbm [shape: f32[8,1], index: 16, kind: output, shape index: {}]
  %s17 = sld [smem:[#allocation0]]
  $region134: #{tpu_custom_call.1} parent=0
    _
  %s19 = ssub.s32 1, %s17
  %s20 = scalar_select 0, %s19, %s17
  %v21 = vstv %s15
  %22 = vst [vmem:[#allocation2] sm:$0x1] %v21
  $region1: #{tpu_custom_call.1} parent=0
    #allocation3 [shape = 'u8[16384]{0}', space=vmem, size = 0x4000, scoped, tag = 'input window, operand 0, single buffered']
    #allocation4 [shape = 's32[1]{0}', space=sflag, size = 0x4, scoped, tag = 'scoped memory for tpu_custom_call.1']
    #allocation5 [shape = 's32[1]{0}', space=sflag, size = 0x4, scoped, tag = 'scoped memory for tpu_custom_call.1']
    #allocation6 [shape = 'u8[2048]{0}', space=vmem, size = 0x800, scoped, tag = 'input window, operand 1, single buffered']
    #allocation7 [shape = 's32[1]{0}', space=sflag, size = 0x4, scoped, tag = 'scoped memory for tpu_custom_call.1']
    #allocation8 [shape = 'u8[16384]{0}', space=vmem, size = 0x4000, scoped, tag = 'input window, operand 2, single buffered']
    #allocation9 [shape = 'u8[32768]{0}', space=vmem, size = 0x8000, scoped, tag = 'input window, operand 3, single buffered']
    #allocation10 [shape = 's32[1]{0}', space=sflag, size = 0x4, scoped, tag = 'scoped memory for tpu_custom_call.1']
    #allocation11 [shape = 'u8[32768]{0}', space=vmem, size = 0x8000, scoped, tag = 'input window, operand 4, single buffered']
    #allocation12 [shape = 'u8[512]{0}', space=vmem, size = 0x400, scoped, tag = 'input window, operand 5, single buffered']
    #allocation13 [shape = 's32[1]{0}', space=sflag, size = 0x4, scoped, tag = 'scoped memory for tpu_custom_call.1']
    #allocation14 [shape = 'u8[32768]{0}', space=vmem, size = 0x8000, scoped, tag = 'input window, operand 6, single buffered']
    #allocation15 [shape = 'u8[32768]{0}', space=vmem, size = 0x8000, scoped, tag = 'input window, operand 7, single buffered']
    #allocation16 [shape = 's32[1]{0}', space=sflag, size = 0x4, scoped, tag = 'scoped memory for tpu_custom_call.1']
    #allocation17 [shape = 'u8[512]{0}', space=vmem, size = 0x400, scoped, tag = 'input window, operand 8, single buffered']
    #allocation18 [shape = 'u8[32768]{0}', space=vmem, size = 0x8000, scoped, tag = 'input window, operand 9, single buffered']
    #allocation19 [shape = 's32[1]{0}', space=sflag, size = 0x4, scoped, tag = 'scoped memory for tpu_custom_call.1']
    #allocation20 [shape = 'u8[32768]{0}', space=vmem, size = 0x8000, scoped, tag = 'input window, operand 10, single buffered']
    #allocation21 [shape = 'u8[512]{0}', space=vmem, size = 0x400, scoped, tag = 'input window, operand 11, single buffered']
    #allocation22 [shape = 's32[1]{0}', space=sflag, size = 0x4, scoped, tag = 'scoped memory for tpu_custom_call.1']
    #allocation23 [shape = 'u8[32768]{0}', space=vmem, size = 0x8000, scoped, tag = 'input window, operand 12, single buffered']
    #allocation24 [shape = 'u8[512]{0}', space=vmem, size = 0x400, scoped, tag = 'input window, operand 13, single buffered']
    #allocation25 [shape = 's32[1]{0}', space=sflag, size = 0x4, scoped, tag = 'scoped memory for tpu_custom_call.1']
    #allocation26 [shape = 'u8[512]{0}', space=vmem, size = 0x400, scoped, tag = 'input window, operand 14, single buffered']
    #allocation27 [shape = 'u8[4096]{0}', space=vmem, size = 0x1000, scoped, tag = 'output window, operand 0, single buffered']
    %23 = vsyncpa [#allocation4], 0
    %24 = vsyncpa [#allocation7], 0
    %25 = vsyncpa [#allocation10], 0
    %26 = vsyncpa [#allocation13], 0
    %27 = vsyncpa [#allocation16], 0
    %28 = vsyncpa [#allocation19], 0
    %29 = vsyncpa [#allocation22], 0
    %30 = vsyncpa [#allocation25], 0
    %31 = vsyncpa [#allocation5], 0
    // Predicated region
    $region2: #{tpu_custom_call.1} parent=1 // pred_check
      _
    $region3: #{tpu_custom_call.1} parent=1 // pred_check_branch
      %33 = sbr.rel (0) target = $region5
    $region4: #{tpu_custom_call.1} parent=1 // pred_region
      %s35 = ssub.s32 512, 512
      %36 = vsyncadd [#allocation4], %s35
      %s37 = sshll.u32 [#allocation3], 4
      %s38 = int_to_ptr.vmem [resolvable:$true] %s37
      %43 = dma.hbm_to_vmem [thread:$0]  %s0, 512, %s38, [#allocation4], 64, 64, 4
    $region5: #{tpu_custom_call.1} parent=1 // pred_fallthru
      _
    // Predicated region
    $region6: #{tpu_custom_call.1} parent=1 // pred_check
      _
    $region7: #{tpu_custom_call.1} parent=1 // pred_check_branch
      %45 = sbr.rel (0) target = $region9
    $region8: #{tpu_custom_call.1} parent=1 // pred_region
      %s47 = ssub.s32 64, 64
      %48 = vsyncadd [#allocation7], %s47
      %s50 = sshll.u32 [#allocation6], 4
      %s51 = int_to_ptr.vmem [resolvable:$true] %s50
      %53 = dma.hbm_to_vmem [thread:$0]  %s1, 64, %s51, [#allocation7]
    $region9: #{tpu_custom_call.1} parent=1 // pred_fallthru
      _
    // Predicated region
    $region10: #{tpu_custom_call.1} parent=1 // pred_check
      _
    $region11: #{tpu_custom_call.1} parent=1 // pred_check_branch
      %55 = sbr.rel (0) target = $region13
    $region12: #{tpu_custom_call.1} parent=1 // pred_region
      %s57 = ssub.s32 512, 512
      %58 = vsyncadd [#allocation7], %s57
      %s59 = sshll.u32 [#allocation8], 4
      %s60 = int_to_ptr.vmem [resolvable:$true] %s59
      %65 = dma.hbm_to_vmem [thread:$0]  %s2, 512, %s60, [#allocation7], 64, 64, 4
    $region13: #{tpu_custom_call.1} parent=1 // pred_fallthru
      _
    // Predicated region
    $region14: #{tpu_custom_call.1} parent=1 // pred_check
      _
    $region15: #{tpu_custom_call.1} parent=1 // pred_check_branch
      %67 = sbr.rel (0) target = $region17
    $region16: #{tpu_custom_call.1} parent=1 // pred_region
      %s69 = ssub.s32 1024, 1024
      %70 = vsyncadd [#allocation10], %s69
      %s71 = sshll.u32 [#allocation9], 4
      %s72 = int_to_ptr.vmem [resolvable:$true] %s71
      %77 = dma.hbm_to_vmem [thread:$0]  %s3, 1024, %s72, [#allocation10], 64, 64, 4
    $region17: #{tpu_custom_call.1} parent=1 // pred_fallthru
      _
    // Predicated region
    $region18: #{tpu_custom_call.1} parent=1 // pred_check
      _
    $region19: #{tpu_custom_call.1} parent=1 // pred_check_branch
      %79 = sbr.rel (0) target = $region21
    $region20: #{tpu_custom_call.1} parent=1 // pred_region
      %s81 = ssub.s32 1024, 1024
      %82 = vsyncadd [#allocation10], %s81
      %s83 = sshll.u32 [#allocation11], 4
      %s84 = int_to_ptr.vmem [resolvable:$true] %s83
      %89 = dma.hbm_to_vmem [thread:$0]  %s4, 1024, %s84, [#allocation10], 64, 64, 4
    $region21: #{tpu_custom_call.1} parent=1 // pred_fallthru
      _
    // Predicated region
    $region22: #{tpu_custom_call.1} parent=1 // pred_check
      _
    $region23: #{tpu_custom_call.1} parent=1 // pred_check_branch
      %91 = sbr.rel (0) target = $region25
    $region24: #{tpu_custom_call.1} parent=1 // pred_region
      %s93 = ssub.s32 16, 16
      %94 = vsyncadd [#allocation13], %s93
      %s96 = sshll.u32 [#allocation12], 4
      %s97 = int_to_ptr.vmem [resolvable:$true] %s96
      %99 = dma.hbm_to_vmem [thread:$0]  %s5, 16, %s97, [#allocation13]
    $region25: #{tpu_custom_call.1} parent=1 // pred_fallthru
      _
    // Predicated region
    $region26: #{tpu_custom_call.1} parent=1 // pred_check
      _
    $region27: #{tpu_custom_call.1} parent=1 // pred_check_branch
      %101 = sbr.rel (0) target = $region29
    $region28: #{tpu_custom_call.1} parent=1 // pred_region
      %s103 = ssub.s32 1024, 1024
      %104 = vsyncadd [#allocation13], %s103
      %s105 = sshll.u32 [#allocation14], 4
      %s106 = int_to_ptr.vmem [resolvable:$true] %s105
      %111 = dma.hbm_to_vmem [thread:$0]  %s6, 1024, %s106, [#allocation13], 64, 64, 4
    $region29: #{tpu_custom_call.1} parent=1 // pred_fallthru
      _
    // Predicated region
    $region30: #{tpu_custom_call.1} parent=1 // pred_check
      _
    $region31: #{tpu_custom_call.1} parent=1 // pred_check_branch
      %113 = sbr.rel (0) target = $region33
    $region32: #{tpu_custom_call.1} parent=1 // pred_region
      %s115 = ssub.s32 1024, 1024
      %116 = vsyncadd [#allocation16], %s115
      %s117 = sshll.u32 [#allocation15], 4
      %s118 = int_to_ptr.vmem [resolvable:$true] %s117
      %123 = dma.hbm_to_vmem [thread:$0]  %s7, 1024, %s118, [#allocation16], 64, 64, 4
    $region33: #{tpu_custom_call.1} parent=1 // pred_fallthru
      _
    // Predicated region
    $region34: #{tpu_custom_call.1} parent=1 // pred_check
      _
    $region35: #{tpu_custom_call.1} parent=1 // pred_check_branch
      %125 = sbr.rel (0) target = $region37
    $region36: #{tpu_custom_call.1} parent=1 // pred_region
      %s127 = ssub.s32 16, 16
      %128 = vsyncadd [#allocation16], %s127
      %s130 = sshll.u32 [#allocation17], 4
      %s131 = int_to_ptr.vmem [resolvable:$true] %s130
      %133 = dma.hbm_to_vmem [thread:$0]  %s8, 16, %s131, [#allocation16]
    $region37: #{tpu_custom_call.1} parent=1 // pred_fallthru
      _
    // Predicated region
    $region38: #{tpu_custom_call.1} parent=1 // pred_check
      _
    $region39: #{tpu_custom_call.1} parent=1 // pred_check_branch
      %135 = sbr.rel (0) target = $region41
    $region40: #{tpu_custom_call.1} parent=1 // pred_region
      %s137 = ssub.s32 1024, 1024
      %138 = vsyncadd [#allocation19], %s137
      %s139 = sshll.u32 [#allocation18], 4
      %s140 = int_to_ptr.vmem [resolvable:$true] %s139
      %145 = dma.hbm_to_vmem [thread:$0]  %s9, 1024, %s140, [#allocation19], 64, 64, 4
    $region41: #{tpu_custom_call.1} parent=1 // pred_fallthru
      _
    // Predicated region
    $region42: #{tpu_custom_call.1} parent=1 // pred_check
      _
    $region43: #{tpu_custom_call.1} parent=1 // pred_check_branch
      %147 = sbr.rel (0) target = $region45
    $region44: #{tpu_custom_call.1} parent=1 // pred_region
      %s149 = ssub.s32 1024, 1024
      %150 = vsyncadd [#allocation19], %s149
      %s151 = sshll.u32 [#allocation20], 4
      %s152 = int_to_ptr.vmem [resolvable:$true] %s151
      %157 = dma.hbm_to_vmem [thread:$0]  %s10, 1024, %s152, [#allocation19], 64, 64, 4
    $region45: #{tpu_custom_call.1} parent=1 // pred_fallthru
      _
    // Predicated region
    $region46: #{tpu_custom_call.1} parent=1 // pred_check
      _
    $region47: #{tpu_custom_call.1} parent=1 // pred_check_branch
      %159 = sbr.rel (0) target = $region49
    $region48: #{tpu_custom_call.1} parent=1 // pred_region
      %s161 = ssub.s32 16, 16
      %162 = vsyncadd [#allocation22], %s161
      %s164 = sshll.u32 [#allocation21], 4
      %s165 = int_to_ptr.vmem [resolvable:$true] %s164
      %167 = dma.hbm_to_vmem [thread:$0]  %s11, 16, %s165, [#allocation22]
    $region49: #{tpu_custom_call.1} parent=1 // pred_fallthru
      _
    // Predicated region
    $region50: #{tpu_custom_call.1} parent=1 // pred_check
      _
    $region51: #{tpu_custom_call.1} parent=1 // pred_check_branch
      %169 = sbr.rel (0) target = $region53
    $region52: #{tpu_custom_call.1} parent=1 // pred_region
      %s171 = ssub.s32 1024, 1024
      %172 = vsyncadd [#allocation22], %s171
      %s173 = sshll.u32 [#allocation23], 4
      %s174 = int_to_ptr.vmem [resolvable:$true] %s173
      %179 = dma.hbm_to_vmem [thread:$0]  %s12, 1024, %s174, [#allocation22], 64, 64, 4
    $region53: #{tpu_custom_call.1} parent=1 // pred_fallthru
      _
    // Predicated region
    $region54: #{tpu_custom_call.1} parent=1 // pred_check
      _
    $region55: #{tpu_custom_call.1} parent=1 // pred_check_branch
      %181 = sbr.rel (0) target = $region57
    $region56: #{tpu_custom_call.1} parent=1 // pred_region
      %s183 = ssub.s32 16, 16
      %184 = vsyncadd [#allocation25], %s183
      %s186 = sshll.u32 [#allocation24], 4
      %s187 = int_to_ptr.vmem [resolvable:$true] %s186
      %189 = dma.hbm_to_vmem [thread:$0]  %s13, 16, %s187, [#allocation25]
    $region57: #{tpu_custom_call.1} parent=1 // pred_fallthru
      _
    // Predicated region
    $region58: #{tpu_custom_call.1} parent=1 // pred_check
      _
    $region59: #{tpu_custom_call.1} parent=1 // pred_check_branch
      %191 = sbr.rel (0) target = $region61
    $region60: #{tpu_custom_call.1} parent=1 // pred_region
      %s193 = ssub.s32 16, 16
      %194 = vsyncadd [#allocation25], %s193
      %s196 = sshll.u32 [#allocation26], 4
      %s197 = int_to_ptr.vmem [resolvable:$true] %s196
      %199 = dma.hbm_to_vmem [thread:$0]  %s14, 16, %s197, [#allocation25]
    $region61: #{tpu_custom_call.1} parent=1 // pred_fallthru
      _
    // Predicated region
    $region62: #{tpu_custom_call.1} parent=1 // pred_check
      _
    $region63: #{tpu_custom_call.1} parent=1 // pred_check_branch
      %201 = sbr.rel (0) target = $region65
    $region64: #{tpu_custom_call.1} parent=1 // pred_region
      _
    $region65: #{tpu_custom_call.1} parent=1 // pred_fallthru
      _
    // Predicated region
    $region66: #{tpu_custom_call.1} parent=1 // pred_check
      _
    $region67: #{tpu_custom_call.1} parent=1 // pred_check_branch
      %203 = sbr.rel (0) target = $region69
    $region68: #{tpu_custom_call.1} parent=1 // pred_region
      %204 = dma.done [#allocation4], 512
    $region69: #{tpu_custom_call.1} parent=1 // pred_fallthru
      _
    // Predicated region
    $region70: #{tpu_custom_call.1} parent=1 // pred_check
      _
    $region71: #{tpu_custom_call.1} parent=1 // pred_check_branch
      %206 = sbr.rel (0) target = $region73
    $region72: #{tpu_custom_call.1} parent=1 // pred_region
      %207 = dma.done [#allocation7], 64
    $region73: #{tpu_custom_call.1} parent=1 // pred_fallthru
      _
    // Predicated region
    $region74: #{tpu_custom_call.1} parent=1 // pred_check
      _
    $region75: #{tpu_custom_call.1} parent=1 // pred_check_branch
      %209 = sbr.rel (0) target = $region77
    $region76: #{tpu_custom_call.1} parent=1 // pred_region
      %210 = dma.done [#allocation7], 512
    $region77: #{tpu_custom_call.1} parent=1 // pred_fallthru
      _
    // Predicated region
    $region78: #{tpu_custom_call.1} parent=1 // pred_check
      _
    $region79: #{tpu_custom_call.1} parent=1 // pred_check_branch
      %212 = sbr.rel (0) target = $region81
    $region80: #{tpu_custom_call.1} parent=1 // pred_region
      %213 = dma.done [#allocation10], 1024
    $region81: #{tpu_custom_call.1} parent=1 // pred_fallthru
      _
    // Predicated region
    $region82: #{tpu_custom_call.1} parent=1 // pred_check
      _
    $region83: #{tpu_custom_call.1} parent=1 // pred_check_branch
      %215 = sbr.rel (0) target = $region85
    $region84: #{tpu_custom_call.1} parent=1 // pred_region
      %216 = dma.done [#allocation10], 1024
    $region85: #{tpu_custom_call.1} parent=1 // pred_fallthru
      _
    // Predicated region
    $region86: #{tpu_custom_call.1} parent=1 // pred_check
      _
    $region87: #{tpu_custom_call.1} parent=1 // pred_check_branch
      %218 = sbr.rel (0) target = $region89
    $region88: #{tpu_custom_call.1} parent=1 // pred_region
      %219 = dma.done [#allocation13], 16
    $region89: #{tpu_custom_call.1} parent=1 // pred_fallthru
      _
    // Predicated region
    $region90: #{tpu_custom_call.1} parent=1 // pred_check
      _
    $region91: #{tpu_custom_call.1} parent=1 // pred_check_branch
      %221 = sbr.rel (0) target = $region93
    $region92: #{tpu_custom_call.1} parent=1 // pred_region
      %222 = dma.done [#allocation13], 1024
    $region93: #{tpu_custom_call.1} parent=1 // pred_fallthru
      _
    // Predicated region
    $region94: #{tpu_custom_call.1} parent=1 // pred_check
      _
    $region95: #{tpu_custom_call.1} parent=1 // pred_check_branch
      %224 = sbr.rel (0) target = $region97
    $region96: #{tpu_custom_call.1} parent=1 // pred_region
      %225 = dma.done [#allocation16], 1024
    $region97: #{tpu_custom_call.1} parent=1 // pred_fallthru
      _
    // Predicated region
    $region98: #{tpu_custom_call.1} parent=1 // pred_check
      _
    $region99: #{tpu_custom_call.1} parent=1 // pred_check_branch
      %227 = sbr.rel (0) target = $region101
    $region100: #{tpu_custom_call.1} parent=1 // pred_region
      %228 = dma.done [#allocation16], 16
    $region101: #{tpu_custom_call.1} parent=1 // pred_fallthru
      _
    // Predicated region
    $region102: #{tpu_custom_call.1} parent=1 // pred_check
      _
    $region103: #{tpu_custom_call.1} parent=1 // pred_check_branch
      %230 = sbr.rel (0) target = $region105
    $region104: #{tpu_custom_call.1} parent=1 // pred_region
      %231 = dma.done [#allocation19], 1024
    $region105: #{tpu_custom_call.1} parent=1 // pred_fallthru
      _
    // Predicated region
    $region106: #{tpu_custom_call.1} parent=1 // pred_check
      _
    $region107: #{tpu_custom_call.1} parent=1 // pred_check_branch
      %233 = sbr.rel (0) target = $region109
    $region108: #{tpu_custom_call.1} parent=1 // pred_region
      %234 = dma.done [#allocation19], 1024
    $region109: #{tpu_custom_call.1} parent=1 // pred_fallthru
      _
    // Predicated region
    $region110: #{tpu_custom_call.1} parent=1 // pred_check
      _
    $region111: #{tpu_custom_call.1} parent=1 // pred_check_branch
      %236 = sbr.rel (0) target = $region113
    $region112: #{tpu_custom_call.1} parent=1 // pred_region
      %237 = dma.done [#allocation22], 16
    $region113: #{tpu_custom_call.1} parent=1 // pred_fallthru
      _
    // Predicated region
    $region114: #{tpu_custom_call.1} parent=1 // pred_check
      _
    $region115: #{tpu_custom_call.1} parent=1 // pred_check_branch
      %239 = sbr.rel (0) target = $region117
    $region116: #{tpu_custom_call.1} parent=1 // pred_region
      %240 = dma.done [#allocation22], 1024
    $region117: #{tpu_custom_call.1} parent=1 // pred_fallthru
      _
    // Predicated region
    $region118: #{tpu_custom_call.1} parent=1 // pred_check
      _
    $region119: #{tpu_custom_call.1} parent=1 // pred_check_branch
      %242 = sbr.rel (0) target = $region121
    $region120: #{tpu_custom_call.1} parent=1 // pred_region
      %243 = dma.done [#allocation25], 16
    $region121: #{tpu_custom_call.1} parent=1 // pred_fallthru
      _
    // Predicated region
    $region122: #{tpu_custom_call.1} parent=1 // pred_check
      _
    $region123: #{tpu_custom_call.1} parent=1 // pred_check_branch
      %245 = sbr.rel (0) target = $region125
    $region124: #{tpu_custom_call.1} parent=1 // pred_region
      %246 = dma.done [#allocation25], 16
    $region125: #{tpu_custom_call.1} parent=1 // pred_fallthru
      _
    %v248 = vld [vmem:[#allocation3] sm:$0xf]
    %v249 = vld [vmem:[#allocation3 + $0x4] sm:$0xf]
    %v250 = vld [vmem:[#allocation3 + $0x8] sm:$0xf]
    %v251 = vld [vmem:[#allocation3 + $0xc] sm:$0xf]
    %v252 = vld [vmem:[#allocation3 + $0x10] sm:$0xf]
    %v253 = vld [vmem:[#allocation3 + $0x14] sm:$0xf]
    %v254 = vld [vmem:[#allocation3 + $0x18] sm:$0xf]
    %v255 = vld [vmem:[#allocation3 + $0x1c] sm:$0xf]
    %v256 = vld [vmem:[#allocation8] sm:$0xf]
    %v257 = vld [vmem:[#allocation8 + $0x4] sm:$0xf]
    %v258 = vld [vmem:[#allocation8 + $0x8] sm:$0xf]
    %v259 = vld [vmem:[#allocation8 + $0xc] sm:$0xf]
    %v260 = vld [vmem:[#allocation8 + $0x10] sm:$0xf]
    %v261 = vld [vmem:[#allocation8 + $0x14] sm:$0xf]
    %v262 = vld [vmem:[#allocation8 + $0x18] sm:$0xf]
    %v263 = vld [vmem:[#allocation8 + $0x1c] sm:$0xf]
    %v272 = vunpack.c.l.b16 %v248
    %v273 = vunpack.c.l.b16 %v249
    %v274 = vunpack.c.l.b16 %v250
    %v275 = vunpack.c.l.b16 %v251
    %v276 = vunpack.c.l.b16 %v252
    %v277 = vunpack.c.l.b16 %v253
    %v278 = vunpack.c.l.b16 %v254
    %v279 = vunpack.c.l.b16 %v255
    %v280 = vpack.c.b16 %v273, %v272
    %v281 = vpack.c.b16 %v275, %v274
    %v282 = vpack.c.b16 %v277, %v276
    %v283 = vpack.c.b16 %v279, %v278
    %v292 = vunpack.c.l.b16 %v256
    %v293 = vunpack.c.l.b16 %v257
    %v294 = vunpack.c.l.b16 %v258
    %v295 = vunpack.c.l.b16 %v259
    %v296 = vunpack.c.l.b16 %v260
    %v297 = vunpack.c.l.b16 %v261
    %v298 = vunpack.c.l.b16 %v262
    %v299 = vunpack.c.l.b16 %v263
    %v300 = vpack.c.b16 %v293, %v292
    %v301 = vpack.c.b16 %v295, %v294
    %v302 = vpack.c.b16 %v297, %v296
    %v303 = vpack.c.b16 %v299, %v298
    %vm308 = vcmask 523264
    %v310 = vsel %vm308, %v280, 0
    %v313 = vsel %vm308, %v281, 0
    %v316 = vsel %vm308, %v282, 0
    %v319 = vsel %vm308, %v283, 0
    %321 = vmatprep.subr.bf16.mxu0 0
    %322 = vmatpush1.bf16.msra.mxu0 %v300
    %323 = vmatprep.subr.bf16.mxu0 0
    %324 = vmatpush1.bf16.msra.mxu0 %v301
    %325 = vmatprep.subr.bf16.mxu0 0
    %326 = vmatpush1.bf16.msra.mxu0 %v302
    %327 = vmatprep.subr.bf16.mxu0 0
    %328 = vmatpush1.bf16.msra.mxu0 %v303
    %329 = vmatprep.subr.bf16.mxu0 0
    %330 = vmatpush1.bf16.msra.mxu0 0
    %331 = vmatprep.subr.bf16.mxu0 0
    %332 = vmatpush1.bf16.msra.mxu0 0
    %333 = vmatprep.subr.bf16.mxu0 0
    %334 = vmatpush1.bf16.msra.mxu0 0
    %335 = vmatprep.subr.bf16.mxu0 0
    %336 = vmatpush1.bf16.msra.mxu0 0
    %337 = vmatprep.subr.bf16.mxu0 0
    %338 = vmatpush1.bf16.msra.mxu0 0
    %339 = vmatprep.subr.bf16.mxu0 0
    %340 = vmatpush1.bf16.msra.mxu0 0
    %341 = vmatprep.subr.bf16.mxu0 0
    %342 = vmatpush1.bf16.msra.mxu0 0
    %343 = vmatprep.subr.bf16.mxu0 0
    %344 = vmatpush1.bf16.msra.mxu0 0
    %345 = vmatprep.subr.bf16.mxu0 0
    %346 = vmatpush1.bf16.msra.mxu0 0
    %347 = vmatprep.subr.bf16.mxu0 0
    %348 = vmatpush1.bf16.msra.mxu0 0
    %349 = vmatprep.subr.bf16.mxu0 0
    %350 = vmatpush1.bf16.msra.mxu0 0
    %351 = vmatprep.subr.bf16.mxu0 0
    %352 = vmatpush1.bf16.msra.mxu0 0
    %353 = vmatprep.mubr.bf16.mxu0 0
    %354 = vmatmul.mubr.bf16.gmra.mrb[0].mxu0 %v310
    %v355 = vpop.f32.mrb[0].mxu0
    %v356 = vadd.f32 0.0, %v355
    %v357 = vpop.f32.mrb[0].mxu0
    %v358 = vpop.f32.mrb[0].mxu0
    %v359 = vadd.f32 0.0, %v358
    %v360 = vpop.f32.mrb[0].mxu0
    %361 = vmatprep.mubr.bf16.mxu0 0
    %362 = vmatmul.mubr.bf16.gmra.mrb[0].mxu0 %v313
    %v363 = vpop.f32.mrb[0].mxu0
    %v364 = vadd.f32 0.0, %v363
    %v365 = vpop.f32.mrb[0].mxu0
    %v366 = vpop.f32.mrb[0].mxu0
    %v367 = vadd.f32 0.0, %v366
    %v368 = vpop.f32.mrb[0].mxu0
    %369 = vmatprep.mubr.bf16.mxu0 0
    %370 = vmatmul.mubr.bf16.gmra.mrb[0].mxu0 %v316
    %v371 = vpop.f32.mrb[0].mxu0
    %v372 = vadd.f32 0.0, %v371
    %v373 = vpop.f32.mrb[0].mxu0
    %v374 = vpop.f32.mrb[0].mxu0
    %v375 = vadd.f32 0.0, %v374
    %v376 = vpop.f32.mrb[0].mxu0
    %377 = vmatprep.mubr.bf16.mxu0 0
    %378 = vmatmul.mubr.bf16.gmra.mrb[0].mxu0 %v319
    %v379 = vpop.f32.mrb[0].mxu0
    %v380 = vadd.f32 0.0, %v379
    %v381 = vpop.f32.mrb[0].mxu0
    %v382 = vpop.f32.mrb[0].mxu0
    %v383 = vadd.f32 0.0, %v382
    %v384 = vpop.f32.mrb[0].mxu0
    %385 = vdwg.mxu0
    %v386 = vpack.c.bf16 %v359, %v356
    %v387 = vpack.c.bf16 %v367, %v364
    %v388 = vpack.c.bf16 %v375, %v372
    %v389 = vpack.c.bf16 %v383, %v380
    %v390 = vld [vmem:[#allocation9] sm:$0xf]
    %v391 = vld [vmem:[#allocation9 + $0x4] sm:$0xf]
    %v392 = vld [vmem:[#allocation9 + $0x8] sm:$0xf]
    %v393 = vld [vmem:[#allocation9 + $0xc] sm:$0xf]
    %v394 = vld [vmem:[#allocation9 + $0x10] sm:$0xf]
    %v395 = vld [vmem:[#allocation9 + $0x14] sm:$0xf]
    %v396 = vld [vmem:[#allocation9 + $0x18] sm:$0xf]
    %v397 = vld [vmem:[#allocation9 + $0x1c] sm:$0xf]
    %v398 = vld [vmem:[#allocation9 + $0x20] sm:$0xf]
    %v399 = vld [vmem:[#allocation9 + $0x24] sm:$0xf]
    %v400 = vld [vmem:[#allocation9 + $0x28] sm:$0xf]
    %v401 = vld [vmem:[#allocation9 + $0x2c] sm:$0xf]
    %v402 = vld [vmem:[#allocation9 + $0x30] sm:$0xf]
    %v403 = vld [vmem:[#allocation9 + $0x34] sm:$0xf]
    %v404 = vld [vmem:[#allocation9 + $0x38] sm:$0xf]
    %v405 = vld [vmem:[#allocation9 + $0x3c] sm:$0xf]
    %v406 = vld [vmem:[#allocation11] sm:$0xf]
    %v407 = vld [vmem:[#allocation11 + $0x4] sm:$0xf]
    %v408 = vld [vmem:[#allocation11 + $0x8] sm:$0xf]
    %v409 = vld [vmem:[#allocation11 + $0xc] sm:$0xf]
    %v410 = vld [vmem:[#allocation11 + $0x10] sm:$0xf]
    %v411 = vld [vmem:[#allocation11 + $0x14] sm:$0xf]
    %v412 = vld [vmem:[#allocation11 + $0x18] sm:$0xf]
    %v413 = vld [vmem:[#allocation11 + $0x1c] sm:$0xf]
    %v414 = vld [vmem:[#allocation11 + $0x20] sm:$0xf]
    %v415 = vld [vmem:[#allocation11 + $0x24] sm:$0xf]
    %v416 = vld [vmem:[#allocation11 + $0x28] sm:$0xf]
    %v417 = vld [vmem:[#allocation11 + $0x2c] sm:$0xf]
    %v418 = vld [vmem:[#allocation11 + $0x30] sm:$0xf]
    %v419 = vld [vmem:[#allocation11 + $0x34] sm:$0xf]
    %v420 = vld [vmem:[#allocation11 + $0x38] sm:$0xf]
    %v421 = vld [vmem:[#allocation11 + $0x3c] sm:$0xf]
    %v438 = vunpack.c.l.b16 %v406
    %v439 = vunpack.c.l.b16 %v407
    %v440 = vunpack.c.l.b16 %v408
    %v441 = vunpack.c.l.b16 %v409
    %v442 = vunpack.c.l.b16 %v410
    %v443 = vunpack.c.l.b16 %v411
    %v444 = vunpack.c.l.b16 %v412
    %v445 = vunpack.c.l.b16 %v413
    %v446 = vunpack.c.l.b16 %v414
    %v447 = vunpack.c.l.b16 %v415
    %v448 = vunpack.c.l.b16 %v416
    %v449 = vunpack.c.l.b16 %v417
    %v450 = vunpack.c.l.b16 %v418
    %v451 = vunpack.c.l.b16 %v419
    %v452 = vunpack.c.l.b16 %v420
    %v453 = vunpack.c.l.b16 %v421
    %v454 = vpack.c.b16 %v439, %v438
    %v455 = vpack.c.b16 %v441, %v440
    %v456 = vpack.c.b16 %v443, %v442
    %v457 = vpack.c.b16 %v445, %v444
    %v458 = vpack.c.b16 %v447, %v446
    %v459 = vpack.c.b16 %v449, %v448
    %v460 = vpack.c.b16 %v451, %v450
    %v461 = vpack.c.b16 %v453, %v452
    %470 = vmatprep.subr.bf16.mxu0 0
    %471 = vmatpush1.bf16.msra.mxu0 %v454
    %472 = vmatprep.subr.bf16.mxu0 0
    %473 = vmatpush1.bf16.msra.mxu0 %v455
    %474 = vmatprep.subr.bf16.mxu0 0
    %475 = vmatpush1.bf16.msra.mxu0 %v456
    %476 = vmatprep.subr.bf16.mxu0 0
    %477 = vmatpush1.bf16.msra.mxu0 %v457
    %478 = vmatprep.subr.bf16.mxu0 0
    %479 = vmatpush1.bf16.msra.mxu0 %v458
    %480 = vmatprep.subr.bf16.mxu0 0
    %481 = vmatpush1.bf16.msra.mxu0 %v459
    %482 = vmatprep.subr.bf16.mxu0 0
    %483 = vmatpush1.bf16.msra.mxu0 %v460
    %484 = vmatprep.subr.bf16.mxu0 0
    %485 = vmatpush1.bf16.msra.mxu0 %v461
    %486 = vmatprep.subr.bf16.mxu0 0
    %487 = vmatpush1.bf16.msra.mxu0 0
    %488 = vmatprep.subr.bf16.mxu0 0
    %489 = vmatpush1.bf16.msra.mxu0 0
    %490 = vmatprep.subr.bf16.mxu0 0
    %491 = vmatpush1.bf16.msra.mxu0 0
    %492 = vmatprep.subr.bf16.mxu0 0
    %493 = vmatpush1.bf16.msra.mxu0 0
    %494 = vmatprep.subr.bf16.mxu0 0
    %495 = vmatpush1.bf16.msra.mxu0 0
    %496 = vmatprep.subr.bf16.mxu0 0
    %497 = vmatpush1.bf16.msra.mxu0 0
    %498 = vmatprep.subr.bf16.mxu0 0
    %499 = vmatpush1.bf16.msra.mxu0 0
    %500 = vmatprep.subr.bf16.mxu0 0
    %501 = vmatpush1.bf16.msra.mxu0 0
    %502 = vmatprep.mubr.bf16.mxu0 0
    %503 = vmatmul.mubr.bf16.gmra.mrb[0].mxu0 %v300
    %v504 = vpop.f32.mrb[0].mxu0
    %v505 = vadd.f32 0.0, %v504
    %v506 = vpop.f32.mrb[0].mxu0
    %v507 = vpop.f32.mrb[0].mxu0
    %v508 = vadd.f32 0.0, %v507
    %v509 = vpop.f32.mrb[0].mxu0
    %510 = vmatprep.mubr.bf16.mxu0 0
    %511 = vmatmul.mubr.bf16.gmra.mrb[0].mxu0 %v301
    %v512 = vpop.f32.mrb[0].mxu0
    %v513 = vadd.f32 0.0, %v512
    %v514 = vpop.f32.mrb[0].mxu0
    %v515 = vpop.f32.mrb[0].mxu0
    %v516 = vadd.f32 0.0, %v515
    %v517 = vpop.f32.mrb[0].mxu0
    %518 = vmatprep.mubr.bf16.mxu0 0
    %519 = vmatmul.mubr.bf16.gmra.mrb[0].mxu0 %v302
    %v520 = vpop.f32.mrb[0].mxu0
    %v521 = vadd.f32 0.0, %v520
    %v522 = vpop.f32.mrb[0].mxu0
    %v523 = vpop.f32.mrb[0].mxu0
    %v524 = vadd.f32 0.0, %v523
    %v525 = vpop.f32.mrb[0].mxu0
    %526 = vmatprep.mubr.bf16.mxu0 0
    %527 = vmatmul.mubr.bf16.gmra.mrb[0].mxu0 %v303
    %v528 = vpop.f32.mrb[0].mxu0
    %v529 = vadd.f32 0.0, %v528
    %v530 = vpop.f32.mrb[0].mxu0
    %v531 = vpop.f32.mrb[0].mxu0
    %v532 = vadd.f32 0.0, %v531
    %v533 = vpop.f32.mrb[0].mxu0
    %534 = vdwg.mxu0
    %v551 = vunpack.c.l.b16 %v390
    %v552 = vunpack.c.l.b16 %v391
    %v553 = vunpack.c.l.b16 %v392
    %v554 = vunpack.c.l.b16 %v393
    %v555 = vunpack.c.l.b16 %v394
    %v556 = vunpack.c.l.b16 %v395
    %v557 = vunpack.c.l.b16 %v396
    %v558 = vunpack.c.l.b16 %v397
    %v559 = vunpack.c.l.b16 %v398
    %v560 = vunpack.c.l.b16 %v399
    %v561 = vunpack.c.l.b16 %v400
    %v562 = vunpack.c.l.b16 %v401
    %v563 = vunpack.c.l.b16 %v402
    %v564 = vunpack.c.l.b16 %v403
    %v565 = vunpack.c.l.b16 %v404
    %v566 = vunpack.c.l.b16 %v405
    %v567 = vpack.c.b16 %v552, %v551
    %v568 = vpack.c.b16 %v554, %v553
    %v569 = vpack.c.b16 %v556, %v555
    %v570 = vpack.c.b16 %v558, %v557
    %v571 = vpack.c.b16 %v560, %v559
    %v572 = vpack.c.b16 %v562, %v561
    %v573 = vpack.c.b16 %v564, %v563
    %v574 = vpack.c.b16 %v566, %v565
    %583 = vmatprep.subr.bf16.mxu0 0
    %584 = vmatpush1.bf16.msra.mxu0 %v567
    %585 = vmatprep.subr.bf16.mxu0 0
    %586 = vmatpush1.bf16.msra.mxu0 %v568
    %587 = vmatprep.subr.bf16.mxu0 0
    %588 = vmatpush1.bf16.msra.mxu0 %v569
    %589 = vmatprep.subr.bf16.mxu0 0
    %590 = vmatpush1.bf16.msra.mxu0 %v570
    %591 = vmatprep.subr.bf16.mxu0 0
    %592 = vmatpush1.bf16.msra.mxu0 %v571
    %593 = vmatprep.subr.bf16.mxu0 0
    %594 = vmatpush1.bf16.msra.mxu0 %v572
    %595 = vmatprep.subr.bf16.mxu0 0
    %596 = vmatpush1.bf16.msra.mxu0 %v573
    %597 = vmatprep.subr.bf16.mxu0 0
    %598 = vmatpush1.bf16.msra.mxu0 %v574
    %599 = vmatprep.subr.bf16.mxu0 0
    %600 = vmatpush1.bf16.msra.mxu0 0
    %601 = vmatprep.subr.bf16.mxu0 0
    %602 = vmatpush1.bf16.msra.mxu0 0
    %603 = vmatprep.subr.bf16.mxu0 0
    %604 = vmatpush1.bf16.msra.mxu0 0
    %605 = vmatprep.subr.bf16.mxu0 0
    %606 = vmatpush1.bf16.msra.mxu0 0
    %607 = vmatprep.subr.bf16.mxu0 0
    %608 = vmatpush1.bf16.msra.mxu0 0
    %609 = vmatprep.subr.bf16.mxu0 0
    %610 = vmatpush1.bf16.msra.mxu0 0
    %611 = vmatprep.subr.bf16.mxu0 0
    %612 = vmatpush1.bf16.msra.mxu0 0
    %613 = vmatprep.subr.bf16.mxu0 0
    %614 = vmatpush1.bf16.msra.mxu0 0
    %615 = vmatprep.mubr.bf16.mxu0 0
    %616 = vmatmul.mubr.bf16.gmra.mrb[0].mxu0 %v386
    %v617 = vpop.f32.mrb[0].mxu0
    %v618 = vadd.f32 %v505, %v617
    %v619 = vpop.f32.mrb[0].mxu0
    %v620 = vpop.f32.mrb[0].mxu0
    %v621 = vadd.f32 %v508, %v620
    %v622 = vpop.f32.mrb[0].mxu0
    %623 = vmatprep.mubr.bf16.mxu0 0
    %624 = vmatmul.mubr.bf16.gmra.mrb[0].mxu0 %v387
    %v625 = vpop.f32.mrb[0].mxu0
    %v626 = vadd.f32 %v513, %v625
    %v627 = vpop.f32.mrb[0].mxu0
    %v628 = vpop.f32.mrb[0].mxu0
    %v629 = vadd.f32 %v516, %v628
    %v630 = vpop.f32.mrb[0].mxu0
    %631 = vmatprep.mubr.bf16.mxu0 0
    %632 = vmatmul.mubr.bf16.gmra.mrb[0].mxu0 %v388
    %v633 = vpop.f32.mrb[0].mxu0
    %v634 = vadd.f32 %v521, %v633
    %v635 = vpop.f32.mrb[0].mxu0
    %v636 = vpop.f32.mrb[0].mxu0
    %v637 = vadd.f32 %v524, %v636
    %v638 = vpop.f32.mrb[0].mxu0
    %639 = vmatprep.mubr.bf16.mxu0 0
    %640 = vmatmul.mubr.bf16.gmra.mrb[0].mxu0 %v389
    %v641 = vpop.f32.mrb[0].mxu0
    %v642 = vadd.f32 %v529, %v641
    %v643 = vpop.f32.mrb[0].mxu0
    %v644 = vpop.f32.mrb[0].mxu0
    %v645 = vadd.f32 %v532, %v644
    %v646 = vpop.f32.mrb[0].mxu0
    %647 = vdwg.mxu0
    %v648 = vld [vmem:[#allocation12] sm:$0x1]
    %v650 = vlaneseq
    %v651 = vshrl.u32 %v650, 7
    %v652 = vsub.s32 0, %v651
    %v653 = vrot.slane %v648, %v652
    %v655 = vadd.f32 %v618, %v653
    %v656 = vadd.f32 %v621, %v653
    %v657 = vadd.f32 %v626, %v653
    %v658 = vadd.f32 %v629, %v653
    %v659 = vadd.f32 %v634, %v653
    %v660 = vadd.f32 %v637, %v653
    %v661 = vadd.f32 %v642, %v653
    %v662 = vadd.f32 %v645, %v653
    %v663 = vmax.f32 %v655, 0.0
    %v664 = vmax.f32 %v656, 0.0
    %v665 = vmax.f32 %v657, 0.0
    %v666 = vmax.f32 %v658, 0.0
    %v667 = vmax.f32 %v659, 0.0
    %v668 = vmax.f32 %v660, 0.0
    %v669 = vmax.f32 %v661, 0.0
    %v670 = vmax.f32 %v662, 0.0
    %v671 = vpack.c.bf16 %v664, %v663
    %v672 = vpack.c.bf16 %v666, %v665
    %v673 = vpack.c.bf16 %v668, %v667
    %v674 = vpack.c.bf16 %v670, %v669
    %675 = vmatprep.subr.bf16.mxu0 0
    %676 = vmatpush1.bf16.msra.mxu0 %v671
    %677 = vmatprep.subr.bf16.mxu0 0
    %678 = vmatpush1.bf16.msra.mxu0 %v672
    %679 = vmatprep.subr.bf16.mxu0 0
    %680 = vmatpush1.bf16.msra.mxu0 %v673
    %681 = vmatprep.subr.bf16.mxu0 0
    %682 = vmatpush1.bf16.msra.mxu0 %v674
    %683 = vmatprep.subr.bf16.mxu0 0
    %684 = vmatpush1.bf16.msra.mxu0 0
    %685 = vmatprep.subr.bf16.mxu0 0
    %686 = vmatpush1.bf16.msra.mxu0 0
    %687 = vmatprep.subr.bf16.mxu0 0
    %688 = vmatpush1.bf16.msra.mxu0 0
    %689 = vmatprep.subr.bf16.mxu0 0
    %690 = vmatpush1.bf16.msra.mxu0 0
    %691 = vmatprep.subr.bf16.mxu0 0
    %692 = vmatpush1.bf16.msra.mxu0 0
    %693 = vmatprep.subr.bf16.mxu0 0
    %694 = vmatpush1.bf16.msra.mxu0 0
    %695 = vmatprep.subr.bf16.mxu0 0
    %696 = vmatpush1.bf16.msra.mxu0 0
    %697 = vmatprep.subr.bf16.mxu0 0
    %698 = vmatpush1.bf16.msra.mxu0 0
    %699 = vmatprep.subr.bf16.mxu0 0
    %700 = vmatpush1.bf16.msra.mxu0 0
    %701 = vmatprep.subr.bf16.mxu0 0
    %702 = vmatpush1.bf16.msra.mxu0 0
    %703 = vmatprep.subr.bf16.mxu0 0
    %704 = vmatpush1.bf16.msra.mxu0 0
    %705 = vmatprep.subr.bf16.mxu0 0
    %706 = vmatpush1.bf16.msra.mxu0 0
    %707 = vmatprep.mubr.bf16.mxu0 0
    %708 = vmatmul.mubr.bf16.gmra.mrb[0].mxu0 %v310
    %v709 = vpop.f32.mrb[0].mxu0
    %v710 = vadd.f32 0.0, %v709
    %v711 = vpop.f32.mrb[0].mxu0
    %v712 = vpop.f32.mrb[0].mxu0
    %v713 = vadd.f32 0.0, %v712
    %v714 = vpop.f32.mrb[0].mxu0
    %715 = vmatprep.mubr.bf16.mxu0 0
    %716 = vmatmul.mubr.bf16.gmra.mrb[0].mxu0 %v313
    %v717 = vpop.f32.mrb[0].mxu0
    %v718 = vadd.f32 0.0, %v717
    %v719 = vpop.f32.mrb[0].mxu0
    %v720 = vpop.f32.mrb[0].mxu0
    %v721 = vadd.f32 0.0, %v720
    %v722 = vpop.f32.mrb[0].mxu0
    %723 = vmatprep.mubr.bf16.mxu0 0
    %724 = vmatmul.mubr.bf16.gmra.mrb[0].mxu0 %v316
    %v725 = vpop.f32.mrb[0].mxu0
    %v726 = vadd.f32 0.0, %v725
    %v727 = vpop.f32.mrb[0].mxu0
    %v728 = vpop.f32.mrb[0].mxu0
    %v729 = vadd.f32 0.0, %v728
    %v730 = vpop.f32.mrb[0].mxu0
    %731 = vmatprep.mubr.bf16.mxu0 0
    %732 = vmatmul.mubr.bf16.gmra.mrb[0].mxu0 %v319
    %v733 = vpop.f32.mrb[0].mxu0
    %v734 = vadd.f32 0.0, %v733
    %v735 = vpop.f32.mrb[0].mxu0
    %v736 = vpop.f32.mrb[0].mxu0
    %v737 = vadd.f32 0.0, %v736
    %v738 = vpop.f32.mrb[0].mxu0
    %739 = vdwg.mxu0
    %v740 = vpack.c.bf16 %v713, %v710
    %v741 = vpack.c.bf16 %v721, %v718
    %v742 = vpack.c.bf16 %v729, %v726
    %v743 = vpack.c.bf16 %v737, %v734
    %v744 = vld [vmem:[#allocation14] sm:$0xf]
    %v745 = vld [vmem:[#allocation14 + $0x4] sm:$0xf]
    %v746 = vld [vmem:[#allocation14 + $0x8] sm:$0xf]
    %v747 = vld [vmem:[#allocation14 + $0xc] sm:$0xf]
    %v748 = vld [vmem:[#allocation14 + $0x10] sm:$0xf]
    %v749 = vld [vmem:[#allocation14 + $0x14] sm:$0xf]
    %v750 = vld [vmem:[#allocation14 + $0x18] sm:$0xf]
    %v751 = vld [vmem:[#allocation14 + $0x1c] sm:$0xf]
    %v752 = vld [vmem:[#allocation14 + $0x20] sm:$0xf]
    %v753 = vld [vmem:[#allocation14 + $0x24] sm:$0xf]
    %v754 = vld [vmem:[#allocation14 + $0x28] sm:$0xf]
    %v755 = vld [vmem:[#allocation14 + $0x2c] sm:$0xf]
    %v756 = vld [vmem:[#allocation14 + $0x30] sm:$0xf]
    %v757 = vld [vmem:[#allocation14 + $0x34] sm:$0xf]
    %v758 = vld [vmem:[#allocation14 + $0x38] sm:$0xf]
    %v759 = vld [vmem:[#allocation14 + $0x3c] sm:$0xf]
    %v760 = vld [vmem:[#allocation15] sm:$0xf]
    %v761 = vld [vmem:[#allocation15 + $0x4] sm:$0xf]
    %v762 = vld [vmem:[#allocation15 + $0x8] sm:$0xf]
    %v763 = vld [vmem:[#allocation15 + $0xc] sm:$0xf]
    %v764 = vld [vmem:[#allocation15 + $0x10] sm:$0xf]
    %v765 = vld [vmem:[#allocation15 + $0x14] sm:$0xf]
    %v766 = vld [vmem:[#allocation15 + $0x18] sm:$0xf]
    %v767 = vld [vmem:[#allocation15 + $0x1c] sm:$0xf]
    %v768 = vld [vmem:[#allocation15 + $0x20] sm:$0xf]
    %v769 = vld [vmem:[#allocation15 + $0x24] sm:$0xf]
    %v770 = vld [vmem:[#allocation15 + $0x28] sm:$0xf]
    %v771 = vld [vmem:[#allocation15 + $0x2c] sm:$0xf]
    %v772 = vld [vmem:[#allocation15 + $0x30] sm:$0xf]
    %v773 = vld [vmem:[#allocation15 + $0x34] sm:$0xf]
    %v774 = vld [vmem:[#allocation15 + $0x38] sm:$0xf]
    %v775 = vld [vmem:[#allocation15 + $0x3c] sm:$0xf]
    %v792 = vunpack.c.l.b16 %v760
    %v793 = vunpack.c.l.b16 %v761
    %v794 = vunpack.c.l.b16 %v762
    %v795 = vunpack.c.l.b16 %v763
    %v796 = vunpack.c.l.b16 %v764
    %v797 = vunpack.c.l.b16 %v765
    %v798 = vunpack.c.l.b16 %v766
    %v799 = vunpack.c.l.b16 %v767
    %v800 = vunpack.c.l.b16 %v768
    %v801 = vunpack.c.l.b16 %v769
    %v802 = vunpack.c.l.b16 %v770
    %v803 = vunpack.c.l.b16 %v771
    %v804 = vunpack.c.l.b16 %v772
    %v805 = vunpack.c.l.b16 %v773
    %v806 = vunpack.c.l.b16 %v774
    %v807 = vunpack.c.l.b16 %v775
    %v808 = vpack.c.b16 %v793, %v792
    %v809 = vpack.c.b16 %v795, %v794
    %v810 = vpack.c.b16 %v797, %v796
    %v811 = vpack.c.b16 %v799, %v798
    %v812 = vpack.c.b16 %v801, %v800
    %v813 = vpack.c.b16 %v803, %v802
    %v814 = vpack.c.b16 %v805, %v804
    %v815 = vpack.c.b16 %v807, %v806
    %824 = vmatprep.subr.bf16.mxu0 0
    %825 = vmatpush1.bf16.msra.mxu0 %v808
    %826 = vmatprep.subr.bf16.mxu0 0
    %827 = vmatpush1.bf16.msra.mxu0 %v809
    %828 = vmatprep.subr.bf16.mxu0 0
    %829 = vmatpush1.bf16.msra.mxu0 %v810
    %830 = vmatprep.subr.bf16.mxu0 0
    %831 = vmatpush1.bf16.msra.mxu0 %v811
    %832 = vmatprep.subr.bf16.mxu0 0
    %833 = vmatpush1.bf16.msra.mxu0 %v812
    %834 = vmatprep.subr.bf16.mxu0 0
    %835 = vmatpush1.bf16.msra.mxu0 %v813
    %836 = vmatprep.subr.bf16.mxu0 0
    %837 = vmatpush1.bf16.msra.mxu0 %v814
    %838 = vmatprep.subr.bf16.mxu0 0
    %839 = vmatpush1.bf16.msra.mxu0 %v815
    %840 = vmatprep.subr.bf16.mxu0 0
    %841 = vmatpush1.bf16.msra.mxu0 0
    %842 = vmatprep.subr.bf16.mxu0 0
    %843 = vmatpush1.bf16.msra.mxu0 0
    %844 = vmatprep.subr.bf16.mxu0 0
    %845 = vmatpush1.bf16.msra.mxu0 0
    %846 = vmatprep.subr.bf16.mxu0 0
    %847 = vmatpush1.bf16.msra.mxu0 0
    %848 = vmatprep.subr.bf16.mxu0 0
    %849 = vmatpush1.bf16.msra.mxu0 0
    %850 = vmatprep.subr.bf16.mxu0 0
    %851 = vmatpush1.bf16.msra.mxu0 0
    %852 = vmatprep.subr.bf16.mxu0 0
    %853 = vmatpush1.bf16.msra.mxu0 0
    %854 = vmatprep.subr.bf16.mxu0 0
    %855 = vmatpush1.bf16.msra.mxu0 0
    %856 = vmatprep.mubr.bf16.mxu0 0
    %857 = vmatmul.mubr.bf16.gmra.mrb[0].mxu0 %v671
    %v858 = vpop.f32.mrb[0].mxu0
    %v859 = vadd.f32 0.0, %v858
    %v860 = vpop.f32.mrb[0].mxu0
    %v861 = vpop.f32.mrb[0].mxu0
    %v862 = vadd.f32 0.0, %v861
    %v863 = vpop.f32.mrb[0].mxu0
    %864 = vmatprep.mubr.bf16.mxu0 0
    %865 = vmatmul.mubr.bf16.gmra.mrb[0].mxu0 %v672
    %v866 = vpop.f32.mrb[0].mxu0
    %v867 = vadd.f32 0.0, %v866
    %v868 = vpop.f32.mrb[0].mxu0
    %v869 = vpop.f32.mrb[0].mxu0
    %v870 = vadd.f32 0.0, %v869
    %v871 = vpop.f32.mrb[0].mxu0
    %872 = vmatprep.mubr.bf16.mxu0 0
    %873 = vmatmul.mubr.bf16.gmra.mrb[0].mxu0 %v673
    %v874 = vpop.f32.mrb[0].mxu0
    %v875 = vadd.f32 0.0, %v874
    %v876 = vpop.f32.mrb[0].mxu0
    %v877 = vpop.f32.mrb[0].mxu0
    %v878 = vadd.f32 0.0, %v877
    %v879 = vpop.f32.mrb[0].mxu0
    %880 = vmatprep.mubr.bf16.mxu0 0
    %881 = vmatmul.mubr.bf16.gmra.mrb[0].mxu0 %v674
    %v882 = vpop.f32.mrb[0].mxu0
    %v883 = vadd.f32 0.0, %v882
    %v884 = vpop.f32.mrb[0].mxu0
    %v885 = vpop.f32.mrb[0].mxu0
    %v886 = vadd.f32 0.0, %v885
    %v887 = vpop.f32.mrb[0].mxu0
    %888 = vdwg.mxu0
    %v905 = vunpack.c.l.b16 %v744
    %v906 = vunpack.c.l.b16 %v745
    %v907 = vunpack.c.l.b16 %v746
    %v908 = vunpack.c.l.b16 %v747
    %v909 = vunpack.c.l.b16 %v748
    %v910 = vunpack.c.l.b16 %v749
    %v911 = vunpack.c.l.b16 %v750
    %v912 = vunpack.c.l.b16 %v751
    %v913 = vunpack.c.l.b16 %v752
    %v914 = vunpack.c.l.b16 %v753
    %v915 = vunpack.c.l.b16 %v754
    %v916 = vunpack.c.l.b16 %v755
    %v917 = vunpack.c.l.b16 %v756
    %v918 = vunpack.c.l.b16 %v757
    %v919 = vunpack.c.l.b16 %v758
    %v920 = vunpack.c.l.b16 %v759
    %v921 = vpack.c.b16 %v906, %v905
    %v922 = vpack.c.b16 %v908, %v907
    %v923 = vpack.c.b16 %v910, %v909
    %v924 = vpack.c.b16 %v912, %v911
    %v925 = vpack.c.b16 %v914, %v913
    %v926 = vpack.c.b16 %v916, %v915
    %v927 = vpack.c.b16 %v918, %v917
    %v928 = vpack.c.b16 %v920, %v919
    %937 = vmatprep.subr.bf16.mxu0 0
    %938 = vmatpush1.bf16.msra.mxu0 %v921
    %939 = vmatprep.subr.bf16.mxu0 0
    %940 = vmatpush1.bf16.msra.mxu0 %v922
    %941 = vmatprep.subr.bf16.mxu0 0
    %942 = vmatpush1.bf16.msra.mxu0 %v923
    %943 = vmatprep.subr.bf16.mxu0 0
    %944 = vmatpush1.bf16.msra.mxu0 %v924
    %945 = vmatprep.subr.bf16.mxu0 0
    %946 = vmatpush1.bf16.msra.mxu0 %v925
    %947 = vmatprep.subr.bf16.mxu0 0
    %948 = vmatpush1.bf16.msra.mxu0 %v926
    %949 = vmatprep.subr.bf16.mxu0 0
    %950 = vmatpush1.bf16.msra.mxu0 %v927
    %951 = vmatprep.subr.bf16.mxu0 0
    %952 = vmatpush1.bf16.msra.mxu0 %v928
    %953 = vmatprep.subr.bf16.mxu0 0
    %954 = vmatpush1.bf16.msra.mxu0 0
    %955 = vmatprep.subr.bf16.mxu0 0
    %956 = vmatpush1.bf16.msra.mxu0 0
    %957 = vmatprep.subr.bf16.mxu0 0
    %958 = vmatpush1.bf16.msra.mxu0 0
    %959 = vmatprep.subr.bf16.mxu0 0
    %960 = vmatpush1.bf16.msra.mxu0 0
    %961 = vmatprep.subr.bf16.mxu0 0
    %962 = vmatpush1.bf16.msra.mxu0 0
    %963 = vmatprep.subr.bf16.mxu0 0
    %964 = vmatpush1.bf16.msra.mxu0 0
    %965 = vmatprep.subr.bf16.mxu0 0
    %966 = vmatpush1.bf16.msra.mxu0 0
    %967 = vmatprep.subr.bf16.mxu0 0
    %968 = vmatpush1.bf16.msra.mxu0 0
    %969 = vmatprep.mubr.bf16.mxu0 0
    %970 = vmatmul.mubr.bf16.gmra.mrb[0].mxu0 %v740
    %v971 = vpop.f32.mrb[0].mxu0
    %v972 = vadd.f32 %v859, %v971
    %v973 = vpop.f32.mrb[0].mxu0
    %v974 = vpop.f32.mrb[0].mxu0
    %v975 = vadd.f32 %v862, %v974
    %v976 = vpop.f32.mrb[0].mxu0
    %977 = vmatprep.mubr.bf16.mxu0 0
    %978 = vmatmul.mubr.bf16.gmra.mrb[0].mxu0 %v741
    %v979 = vpop.f32.mrb[0].mxu0
    %v980 = vadd.f32 %v867, %v979
    %v981 = vpop.f32.mrb[0].mxu0
    %v982 = vpop.f32.mrb[0].mxu0
    %v983 = vadd.f32 %v870, %v982
    %v984 = vpop.f32.mrb[0].mxu0
    %985 = vmatprep.mubr.bf16.mxu0 0
    %986 = vmatmul.mubr.bf16.gmra.mrb[0].mxu0 %v742
    %v987 = vpop.f32.mrb[0].mxu0
    %v988 = vadd.f32 %v875, %v987
    %v989 = vpop.f32.mrb[0].mxu0
    %v990 = vpop.f32.mrb[0].mxu0
    %v991 = vadd.f32 %v878, %v990
    %v992 = vpop.f32.mrb[0].mxu0
    %993 = vmatprep.mubr.bf16.mxu0 0
    %994 = vmatmul.mubr.bf16.gmra.mrb[0].mxu0 %v743
    %v995 = vpop.f32.mrb[0].mxu0
    %v996 = vadd.f32 %v883, %v995
    %v997 = vpop.f32.mrb[0].mxu0
    %v998 = vpop.f32.mrb[0].mxu0
    %v999 = vadd.f32 %v886, %v998
    %v1000 = vpop.f32.mrb[0].mxu0
    %1001 = vdwg.mxu0
    %v1002 = vld [vmem:[#allocation17] sm:$0x1]
    %v1004 = vlaneseq
    %v1005 = vshrl.u32 %v1004, 7
    %v1006 = vsub.s32 0, %v1005
    %v1007 = vrot.slane %v1002, %v1006
    %v1009 = vadd.f32 %v972, %v1007
    %v1010 = vadd.f32 %v975, %v1007
    %v1011 = vadd.f32 %v980, %v1007
    %v1012 = vadd.f32 %v983, %v1007
    %v1013 = vadd.f32 %v988, %v1007
    %v1014 = vadd.f32 %v991, %v1007
    %v1015 = vadd.f32 %v996, %v1007
    %v1016 = vadd.f32 %v999, %v1007
    %v1017 = vmax.f32 %v1009, 0.0
    %v1018 = vmax.f32 %v1010, 0.0
    %v1019 = vmax.f32 %v1011, 0.0
    %v1020 = vmax.f32 %v1012, 0.0
    %v1021 = vmax.f32 %v1013, 0.0
    %v1022 = vmax.f32 %v1014, 0.0
    %v1023 = vmax.f32 %v1015, 0.0
    %v1024 = vmax.f32 %v1016, 0.0
    %v1025 = vpack.c.bf16 %v1018, %v1017
    %v1026 = vpack.c.bf16 %v1020, %v1019
    %v1027 = vpack.c.bf16 %v1022, %v1021
    %v1028 = vpack.c.bf16 %v1024, %v1023
    %1029 = vmatprep.subr.bf16.mxu0 0
    %1030 = vmatpush1.bf16.msra.mxu0 %v1025
    %1031 = vmatprep.subr.bf16.mxu0 0
    %1032 = vmatpush1.bf16.msra.mxu0 %v1026
    %1033 = vmatprep.subr.bf16.mxu0 0
    %1034 = vmatpush1.bf16.msra.mxu0 %v1027
    %1035 = vmatprep.subr.bf16.mxu0 0
    %1036 = vmatpush1.bf16.msra.mxu0 %v1028
    %1037 = vmatprep.subr.bf16.mxu0 0
    %1038 = vmatpush1.bf16.msra.mxu0 0
    %1039 = vmatprep.subr.bf16.mxu0 0
    %1040 = vmatpush1.bf16.msra.mxu0 0
    %1041 = vmatprep.subr.bf16.mxu0 0
    %1042 = vmatpush1.bf16.msra.mxu0 0
    %1043 = vmatprep.subr.bf16.mxu0 0
    %1044 = vmatpush1.bf16.msra.mxu0 0
    %1045 = vmatprep.subr.bf16.mxu0 0
    %1046 = vmatpush1.bf16.msra.mxu0 0
    %1047 = vmatprep.subr.bf16.mxu0 0
    %1048 = vmatpush1.bf16.msra.mxu0 0
    %1049 = vmatprep.subr.bf16.mxu0 0
    %1050 = vmatpush1.bf16.msra.mxu0 0
    %1051 = vmatprep.subr.bf16.mxu0 0
    %1052 = vmatpush1.bf16.msra.mxu0 0
    %1053 = vmatprep.subr.bf16.mxu0 0
    %1054 = vmatpush1.bf16.msra.mxu0 0
    %1055 = vmatprep.subr.bf16.mxu0 0
    %1056 = vmatpush1.bf16.msra.mxu0 0
    %1057 = vmatprep.subr.bf16.mxu0 0
    %1058 = vmatpush1.bf16.msra.mxu0 0
    %1059 = vmatprep.subr.bf16.mxu0 0
    %1060 = vmatpush1.bf16.msra.mxu0 0
    %1061 = vmatprep.mubr.bf16.mxu0 0
    %1062 = vmatmul.mubr.bf16.gmra.mrb[0].mxu0 %v310
    %v1063 = vpop.f32.mrb[0].mxu0
    %v1064 = vadd.f32 0.0, %v1063
    %v1065 = vpop.f32.mrb[0].mxu0
    %v1066 = vpop.f32.mrb[0].mxu0
    %v1067 = vadd.f32 0.0, %v1066
    %v1068 = vpop.f32.mrb[0].mxu0
    %1069 = vmatprep.mubr.bf16.mxu0 0
    %1070 = vmatmul.mubr.bf16.gmra.mrb[0].mxu0 %v313
    %v1071 = vpop.f32.mrb[0].mxu0
    %v1072 = vadd.f32 0.0, %v1071
    %v1073 = vpop.f32.mrb[0].mxu0
    %v1074 = vpop.f32.mrb[0].mxu0
    %v1075 = vadd.f32 0.0, %v1074
    %v1076 = vpop.f32.mrb[0].mxu0
    %1077 = vmatprep.mubr.bf16.mxu0 0
    %1078 = vmatmul.mubr.bf16.gmra.mrb[0].mxu0 %v316
    %v1079 = vpop.f32.mrb[0].mxu0
    %v1080 = vadd.f32 0.0, %v1079
    %v1081 = vpop.f32.mrb[0].mxu0
    %v1082 = vpop.f32.mrb[0].mxu0
    %v1083 = vadd.f32 0.0, %v1082
    %v1084 = vpop.f32.mrb[0].mxu0
    %1085 = vmatprep.mubr.bf16.mxu0 0
    %1086 = vmatmul.mubr.bf16.gmra.mrb[0].mxu0 %v319
    %v1087 = vpop.f32.mrb[0].mxu0
    %v1088 = vadd.f32 0.0, %v1087
    %v1089 = vpop.f32.mrb[0].mxu0
    %v1090 = vpop.f32.mrb[0].mxu0
    %v1091 = vadd.f32 0.0, %v1090
    %v1092 = vpop.f32.mrb[0].mxu0
    %1093 = vdwg.mxu0
    %v1094 = vpack.c.bf16 %v1067, %v1064
    %v1095 = vpack.c.bf16 %v1075, %v1072
    %v1096 = vpack.c.bf16 %v1083, %v1080
    %v1097 = vpack.c.bf16 %v1091, %v1088
    %v1098 = vld [vmem:[#allocation18] sm:$0xf]
    %v1099 = vld [vmem:[#allocation18 + $0x4] sm:$0xf]
    %v1100 = vld [vmem:[#allocation18 + $0x8] sm:$0xf]
    %v1101 = vld [vmem:[#allocation18 + $0xc] sm:$0xf]
    %v1102 = vld [vmem:[#allocation18 + $0x10] sm:$0xf]
    %v1103 = vld [vmem:[#allocation18 + $0x14] sm:$0xf]
    %v1104 = vld [vmem:[#allocation18 + $0x18] sm:$0xf]
    %v1105 = vld [vmem:[#allocation18 + $0x1c] sm:$0xf]
    %v1106 = vld [vmem:[#allocation18 + $0x20] sm:$0xf]
    %v1107 = vld [vmem:[#allocation18 + $0x24] sm:$0xf]
    %v1108 = vld [vmem:[#allocation18 + $0x28] sm:$0xf]
    %v1109 = vld [vmem:[#allocation18 + $0x2c] sm:$0xf]
    %v1110 = vld [vmem:[#allocation18 + $0x30] sm:$0xf]
    %v1111 = vld [vmem:[#allocation18 + $0x34] sm:$0xf]
    %v1112 = vld [vmem:[#allocation18 + $0x38] sm:$0xf]
    %v1113 = vld [vmem:[#allocation18 + $0x3c] sm:$0xf]
    %v1114 = vld [vmem:[#allocation20] sm:$0xf]
    %v1115 = vld [vmem:[#allocation20 + $0x4] sm:$0xf]
    %v1116 = vld [vmem:[#allocation20 + $0x8] sm:$0xf]
    %v1117 = vld [vmem:[#allocation20 + $0xc] sm:$0xf]
    %v1118 = vld [vmem:[#allocation20 + $0x10] sm:$0xf]
    %v1119 = vld [vmem:[#allocation20 + $0x14] sm:$0xf]
    %v1120 = vld [vmem:[#allocation20 + $0x18] sm:$0xf]
    %v1121 = vld [vmem:[#allocation20 + $0x1c] sm:$0xf]
    %v1122 = vld [vmem:[#allocation20 + $0x20] sm:$0xf]
    %v1123 = vld [vmem:[#allocation20 + $0x24] sm:$0xf]
    %v1124 = vld [vmem:[#allocation20 + $0x28] sm:$0xf]
    %v1125 = vld [vmem:[#allocation20 + $0x2c] sm:$0xf]
    %v1126 = vld [vmem:[#allocation20 + $0x30] sm:$0xf]
    %v1127 = vld [vmem:[#allocation20 + $0x34] sm:$0xf]
    %v1128 = vld [vmem:[#allocation20 + $0x38] sm:$0xf]
    %v1129 = vld [vmem:[#allocation20 + $0x3c] sm:$0xf]
    %v1146 = vunpack.c.l.b16 %v1114
    %v1147 = vunpack.c.l.b16 %v1115
    %v1148 = vunpack.c.l.b16 %v1116
    %v1149 = vunpack.c.l.b16 %v1117
    %v1150 = vunpack.c.l.b16 %v1118
    %v1151 = vunpack.c.l.b16 %v1119
    %v1152 = vunpack.c.l.b16 %v1120
    %v1153 = vunpack.c.l.b16 %v1121
    %v1154 = vunpack.c.l.b16 %v1122
    %v1155 = vunpack.c.l.b16 %v1123
    %v1156 = vunpack.c.l.b16 %v1124
    %v1157 = vunpack.c.l.b16 %v1125
    %v1158 = vunpack.c.l.b16 %v1126
    %v1159 = vunpack.c.l.b16 %v1127
    %v1160 = vunpack.c.l.b16 %v1128
    %v1161 = vunpack.c.l.b16 %v1129
    %v1162 = vpack.c.b16 %v1147, %v1146
    %v1163 = vpack.c.b16 %v1149, %v1148
    %v1164 = vpack.c.b16 %v1151, %v1150
    %v1165 = vpack.c.b16 %v1153, %v1152
    %v1166 = vpack.c.b16 %v1155, %v1154
    %v1167 = vpack.c.b16 %v1157, %v1156
    %v1168 = vpack.c.b16 %v1159, %v1158
    %v1169 = vpack.c.b16 %v1161, %v1160
    %1178 = vmatprep.subr.bf16.mxu0 0
    %1179 = vmatpush1.bf16.msra.mxu0 %v1162
    %1180 = vmatprep.subr.bf16.mxu0 0
    %1181 = vmatpush1.bf16.msra.mxu0 %v1163
    %1182 = vmatprep.subr.bf16.mxu0 0
    %1183 = vmatpush1.bf16.msra.mxu0 %v1164
    %1184 = vmatprep.subr.bf16.mxu0 0
    %1185 = vmatpush1.bf16.msra.mxu0 %v1165
    %1186 = vmatprep.subr.bf16.mxu0 0
    %1187 = vmatpush1.bf16.msra.mxu0 %v1166
    %1188 = vmatprep.subr.bf16.mxu0 0
    %1189 = vmatpush1.bf16.msra.mxu0 %v1167
    %1190 = vmatprep.subr.bf16.mxu0 0
    %1191 = vmatpush1.bf16.msra.mxu0 %v1168
    %1192 = vmatprep.subr.bf16.mxu0 0
    %1193 = vmatpush1.bf16.msra.mxu0 %v1169
    %1194 = vmatprep.subr.bf16.mxu0 0
    %1195 = vmatpush1.bf16.msra.mxu0 0
    %1196 = vmatprep.subr.bf16.mxu0 0
    %1197 = vmatpush1.bf16.msra.mxu0 0
    %1198 = vmatprep.subr.bf16.mxu0 0
    %1199 = vmatpush1.bf16.msra.mxu0 0
    %1200 = vmatprep.subr.bf16.mxu0 0
    %1201 = vmatpush1.bf16.msra.mxu0 0
    %1202 = vmatprep.subr.bf16.mxu0 0
    %1203 = vmatpush1.bf16.msra.mxu0 0
    %1204 = vmatprep.subr.bf16.mxu0 0
    %1205 = vmatpush1.bf16.msra.mxu0 0
    %1206 = vmatprep.subr.bf16.mxu0 0
    %1207 = vmatpush1.bf16.msra.mxu0 0
    %1208 = vmatprep.subr.bf16.mxu0 0
    %1209 = vmatpush1.bf16.msra.mxu0 0
    %1210 = vmatprep.mubr.bf16.mxu0 0
    %1211 = vmatmul.mubr.bf16.gmra.mrb[0].mxu0 %v1025
    %v1212 = vpop.f32.mrb[0].mxu0
    %v1213 = vadd.f32 0.0, %v1212
    %v1214 = vpop.f32.mrb[0].mxu0
    %v1215 = vpop.f32.mrb[0].mxu0
    %v1216 = vadd.f32 0.0, %v1215
    %v1217 = vpop.f32.mrb[0].mxu0
    %1218 = vmatprep.mubr.bf16.mxu0 0
    %1219 = vmatmul.mubr.bf16.gmra.mrb[0].mxu0 %v1026
    %v1220 = vpop.f32.mrb[0].mxu0
    %v1221 = vadd.f32 0.0, %v1220
    %v1222 = vpop.f32.mrb[0].mxu0
    %v1223 = vpop.f32.mrb[0].mxu0
    %v1224 = vadd.f32 0.0, %v1223
    %v1225 = vpop.f32.mrb[0].mxu0
    %1226 = vmatprep.mubr.bf16.mxu0 0
    %1227 = vmatmul.mubr.bf16.gmra.mrb[0].mxu0 %v1027
    %v1228 = vpop.f32.mrb[0].mxu0
    %v1229 = vadd.f32 0.0, %v1228
    %v1230 = vpop.f32.mrb[0].mxu0
    %v1231 = vpop.f32.mrb[0].mxu0
    %v1232 = vadd.f32 0.0, %v1231
    %v1233 = vpop.f32.mrb[0].mxu0
    %1234 = vmatprep.mubr.bf16.mxu0 0
    %1235 = vmatmul.mubr.bf16.gmra.mrb[0].mxu0 %v1028
    %v1236 = vpop.f32.mrb[0].mxu0
    %v1237 = vadd.f32 0.0, %v1236
    %v1238 = vpop.f32.mrb[0].mxu0
    %v1239 = vpop.f32.mrb[0].mxu0
    %v1240 = vadd.f32 0.0, %v1239
    %v1241 = vpop.f32.mrb[0].mxu0
    %1242 = vdwg.mxu0
    %v1259 = vunpack.c.l.b16 %v1098
    %v1260 = vunpack.c.l.b16 %v1099
    %v1261 = vunpack.c.l.b16 %v1100
    %v1262 = vunpack.c.l.b16 %v1101
    %v1263 = vunpack.c.l.b16 %v1102
    %v1264 = vunpack.c.l.b16 %v1103
    %v1265 = vunpack.c.l.b16 %v1104
    %v1266 = vunpack.c.l.b16 %v1105
    %v1267 = vunpack.c.l.b16 %v1106
    %v1268 = vunpack.c.l.b16 %v1107
    %v1269 = vunpack.c.l.b16 %v1108
    %v1270 = vunpack.c.l.b16 %v1109
    %v1271 = vunpack.c.l.b16 %v1110
    %v1272 = vunpack.c.l.b16 %v1111
    %v1273 = vunpack.c.l.b16 %v1112
    %v1274 = vunpack.c.l.b16 %v1113
    %v1275 = vpack.c.b16 %v1260, %v1259
    %v1276 = vpack.c.b16 %v1262, %v1261
    %v1277 = vpack.c.b16 %v1264, %v1263
    %v1278 = vpack.c.b16 %v1266, %v1265
    %v1279 = vpack.c.b16 %v1268, %v1267
    %v1280 = vpack.c.b16 %v1270, %v1269
    %v1281 = vpack.c.b16 %v1272, %v1271
    %v1282 = vpack.c.b16 %v1274, %v1273
    %1291 = vmatprep.subr.bf16.mxu0 0
    %1292 = vmatpush1.bf16.msra.mxu0 %v1275
    %1293 = vmatprep.subr.bf16.mxu0 0
    %1294 = vmatpush1.bf16.msra.mxu0 %v1276
    %1295 = vmatprep.subr.bf16.mxu0 0
    %1296 = vmatpush1.bf16.msra.mxu0 %v1277
    %1297 = vmatprep.subr.bf16.mxu0 0
    %1298 = vmatpush1.bf16.msra.mxu0 %v1278
    %1299 = vmatprep.subr.bf16.mxu0 0
    %1300 = vmatpush1.bf16.msra.mxu0 %v1279
    %1301 = vmatprep.subr.bf16.mxu0 0
    %1302 = vmatpush1.bf16.msra.mxu0 %v1280
    %1303 = vmatprep.subr.bf16.mxu0 0
    %1304 = vmatpush1.bf16.msra.mxu0 %v1281
    %1305 = vmatprep.subr.bf16.mxu0 0
    %1306 = vmatpush1.bf16.msra.mxu0 %v1282
    %1307 = vmatprep.subr.bf16.mxu0 0
    %1308 = vmatpush1.bf16.msra.mxu0 0
    %1309 = vmatprep.subr.bf16.mxu0 0
    %1310 = vmatpush1.bf16.msra.mxu0 0
    %1311 = vmatprep.subr.bf16.mxu0 0
    %1312 = vmatpush1.bf16.msra.mxu0 0
    %1313 = vmatprep.subr.bf16.mxu0 0
    %1314 = vmatpush1.bf16.msra.mxu0 0
    %1315 = vmatprep.subr.bf16.mxu0 0
    %1316 = vmatpush1.bf16.msra.mxu0 0
    %1317 = vmatprep.subr.bf16.mxu0 0
    %1318 = vmatpush1.bf16.msra.mxu0 0
    %1319 = vmatprep.subr.bf16.mxu0 0
    %1320 = vmatpush1.bf16.msra.mxu0 0
    %1321 = vmatprep.subr.bf16.mxu0 0
    %1322 = vmatpush1.bf16.msra.mxu0 0
    %1323 = vmatprep.mubr.bf16.mxu0 0
    %1324 = vmatmul.mubr.bf16.gmra.mrb[0].mxu0 %v1094
    %v1325 = vpop.f32.mrb[0].mxu0
    %v1326 = vadd.f32 %v1213, %v1325
    %v1327 = vpop.f32.mrb[0].mxu0
    %v1328 = vpop.f32.mrb[0].mxu0
    %v1329 = vadd.f32 %v1216, %v1328
    %v1330 = vpop.f32.mrb[0].mxu0
    %1331 = vmatprep.mubr.bf16.mxu0 0
    %1332 = vmatmul.mubr.bf16.gmra.mrb[0].mxu0 %v1095
    %v1333 = vpop.f32.mrb[0].mxu0
    %v1334 = vadd.f32 %v1221, %v1333
    %v1335 = vpop.f32.mrb[0].mxu0
    %v1336 = vpop.f32.mrb[0].mxu0
    %v1337 = vadd.f32 %v1224, %v1336
    %v1338 = vpop.f32.mrb[0].mxu0
    %1339 = vmatprep.mubr.bf16.mxu0 0
    %1340 = vmatmul.mubr.bf16.gmra.mrb[0].mxu0 %v1096
    %v1341 = vpop.f32.mrb[0].mxu0
    %v1342 = vadd.f32 %v1229, %v1341
    %v1343 = vpop.f32.mrb[0].mxu0
    %v1344 = vpop.f32.mrb[0].mxu0
    %v1345 = vadd.f32 %v1232, %v1344
    %v1346 = vpop.f32.mrb[0].mxu0
    %1347 = vmatprep.mubr.bf16.mxu0 0
    %1348 = vmatmul.mubr.bf16.gmra.mrb[0].mxu0 %v1097
    %v1349 = vpop.f32.mrb[0].mxu0
    %v1350 = vadd.f32 %v1237, %v1349
    %v1351 = vpop.f32.mrb[0].mxu0
    %v1352 = vpop.f32.mrb[0].mxu0
    %v1353 = vadd.f32 %v1240, %v1352
    %v1354 = vpop.f32.mrb[0].mxu0
    %1355 = vdwg.mxu0
    %v1356 = vld [vmem:[#allocation21] sm:$0x1]
    %v1358 = vlaneseq
    %v1359 = vshrl.u32 %v1358, 7
    %v1360 = vsub.s32 0, %v1359
    %v1361 = vrot.slane %v1356, %v1360
    %v1363 = vadd.f32 %v1326, %v1361
    %v1364 = vadd.f32 %v1329, %v1361
    %v1365 = vadd.f32 %v1334, %v1361
    %v1366 = vadd.f32 %v1337, %v1361
    %v1367 = vadd.f32 %v1342, %v1361
    %v1368 = vadd.f32 %v1345, %v1361
    %v1369 = vadd.f32 %v1350, %v1361
    %v1370 = vadd.f32 %v1353, %v1361
    %v1371 = vmax.f32 %v1363, 0.0
    %v1372 = vmax.f32 %v1364, 0.0
    %v1373 = vmax.f32 %v1365, 0.0
    %v1374 = vmax.f32 %v1366, 0.0
    %v1375 = vmax.f32 %v1367, 0.0
    %v1376 = vmax.f32 %v1368, 0.0
    %v1377 = vmax.f32 %v1369, 0.0
    %v1378 = vmax.f32 %v1370, 0.0
    %v1379 = vpack.c.bf16 %v1372, %v1371
    %v1380 = vpack.c.bf16 %v1374, %v1373
    %v1381 = vpack.c.bf16 %v1376, %v1375
    %v1382 = vpack.c.bf16 %v1378, %v1377
    %v1383 = vld [vmem:[#allocation6] sm:$0xf]
    %v1385 = vsel %vm308, %v1383, 0
    %1387 = vmatprep.subr.bf16.mxu0 0
    %1388 = vmatpush1.bf16.msra.mxu0 %v1379
    %1389 = vmatprep.subr.bf16.mxu0 0
    %1390 = vmatpush1.bf16.msra.mxu0 %v1380
    %1391 = vmatprep.subr.bf16.mxu0 0
    %1392 = vmatpush1.bf16.msra.mxu0 %v1381
    %1393 = vmatprep.subr.bf16.mxu0 0
    %1394 = vmatpush1.bf16.msra.mxu0 %v1382
    %1395 = vmatprep.subr.bf16.mxu0 0
    %1396 = vmatpush1.bf16.msra.mxu0 0
    %1397 = vmatprep.subr.bf16.mxu0 0
    %1398 = vmatpush1.bf16.msra.mxu0 0
    %1399 = vmatprep.subr.bf16.mxu0 0
    %1400 = vmatpush1.bf16.msra.mxu0 0
    %1401 = vmatprep.subr.bf16.mxu0 0
    %1402 = vmatpush1.bf16.msra.mxu0 0
    %1403 = vmatprep.subr.bf16.mxu0 0
    %1404 = vmatpush1.bf16.msra.mxu0 0
    %1405 = vmatprep.subr.bf16.mxu0 0
    %1406 = vmatpush1.bf16.msra.mxu0 0
    %1407 = vmatprep.subr.bf16.mxu0 0
    %1408 = vmatpush1.bf16.msra.mxu0 0
    %1409 = vmatprep.subr.bf16.mxu0 0
    %1410 = vmatpush1.bf16.msra.mxu0 0
    %1411 = vmatprep.subr.bf16.mxu0 0
    %1412 = vmatpush1.bf16.msra.mxu0 0
    %1413 = vmatprep.subr.bf16.mxu0 0
    %1414 = vmatpush1.bf16.msra.mxu0 0
    %1415 = vmatprep.subr.bf16.mxu0 0
    %1416 = vmatpush1.bf16.msra.mxu0 0
    %1417 = vmatprep.subr.bf16.mxu0 0
    %1418 = vmatpush1.bf16.msra.mxu0 0
    %1419 = vmatprep.mubr.bf16.mxu0 0
    %1420 = vmatmul.mubr.bf16.gmra.mrb[0].mxu0 %v1385
    %v1421 = vpop.f32.mrb[0].mxu0
    %v1422 = vadd.f32 0.0, %v1421
    %v1423 = vpop.f32.mrb[0].mxu0
    %v1424 = vpop.f32.mrb[0].mxu0
    %v1425 = vpop.f32.mrb[0].mxu0
    %1426 = vdwg.mxu0
    %v1427 = vpack.c.bf16 %v1422, %v1422
    %v1428 = vld [vmem:[#allocation23] sm:$0xf]
    %v1429 = vld [vmem:[#allocation23 + $0x4] sm:$0xf]
    %v1430 = vld [vmem:[#allocation23 + $0x8] sm:$0xf]
    %v1431 = vld [vmem:[#allocation23 + $0xc] sm:$0xf]
    %v1432 = vld [vmem:[#allocation23 + $0x10] sm:$0xf]
    %v1433 = vld [vmem:[#allocation23 + $0x14] sm:$0xf]
    %v1434 = vld [vmem:[#allocation23 + $0x18] sm:$0xf]
    %v1435 = vld [vmem:[#allocation23 + $0x1c] sm:$0xf]
    %v1436 = vld [vmem:[#allocation23 + $0x20] sm:$0xf]
    %v1437 = vld [vmem:[#allocation23 + $0x24] sm:$0xf]
    %v1438 = vld [vmem:[#allocation23 + $0x28] sm:$0xf]
    %v1439 = vld [vmem:[#allocation23 + $0x2c] sm:$0xf]
    %v1440 = vld [vmem:[#allocation23 + $0x30] sm:$0xf]
    %v1441 = vld [vmem:[#allocation23 + $0x34] sm:$0xf]
    %v1442 = vld [vmem:[#allocation23 + $0x38] sm:$0xf]
    %v1443 = vld [vmem:[#allocation23 + $0x3c] sm:$0xf]
    %v1444 = vld [vmem:[#allocation24] sm:$0x1]
    %v1446 = vlaneseq
    %v1447 = vshrl.u32 %v1446, 7
    %v1448 = vsub.s32 0, %v1447
    %v1449 = vrot.slane %v1444, %v1448
    %v1467 = vunpack.c.l.b16 %v1428
    %v1468 = vunpack.c.l.b16 %v1429
    %v1469 = vunpack.c.l.b16 %v1430
    %v1470 = vunpack.c.l.b16 %v1431
    %v1471 = vunpack.c.l.b16 %v1432
    %v1472 = vunpack.c.l.b16 %v1433
    %v1473 = vunpack.c.l.b16 %v1434
    %v1474 = vunpack.c.l.b16 %v1435
    %v1475 = vunpack.c.l.b16 %v1436
    %v1476 = vunpack.c.l.b16 %v1437
    %v1477 = vunpack.c.l.b16 %v1438
    %v1478 = vunpack.c.l.b16 %v1439
    %v1479 = vunpack.c.l.b16 %v1440
    %v1480 = vunpack.c.l.b16 %v1441
    %v1481 = vunpack.c.l.b16 %v1442
    %v1482 = vunpack.c.l.b16 %v1443
    %v1483 = vpack.c.b16 %v1468, %v1467
    %v1484 = vpack.c.b16 %v1470, %v1469
    %v1485 = vpack.c.b16 %v1472, %v1471
    %v1486 = vpack.c.b16 %v1474, %v1473
    %v1487 = vpack.c.b16 %v1476, %v1475
    %v1488 = vpack.c.b16 %v1478, %v1477
    %v1489 = vpack.c.b16 %v1480, %v1479
    %v1490 = vpack.c.b16 %v1482, %v1481
    %1499 = vmatprep.subr.bf16.mxu0 0
    %1500 = vmatpush1.bf16.msra.mxu0 %v1483
    %1501 = vmatprep.subr.bf16.mxu0 0
    %1502 = vmatpush1.bf16.msra.mxu0 %v1484
    %1503 = vmatprep.subr.bf16.mxu0 0
    %1504 = vmatpush1.bf16.msra.mxu0 %v1485
    %1505 = vmatprep.subr.bf16.mxu0 0
    %1506 = vmatpush1.bf16.msra.mxu0 %v1486
    %1507 = vmatprep.subr.bf16.mxu0 0
    %1508 = vmatpush1.bf16.msra.mxu0 %v1487
    %1509 = vmatprep.subr.bf16.mxu0 0
    %1510 = vmatpush1.bf16.msra.mxu0 %v1488
    %1511 = vmatprep.subr.bf16.mxu0 0
    %1512 = vmatpush1.bf16.msra.mxu0 %v1489
    %1513 = vmatprep.subr.bf16.mxu0 0
    %1514 = vmatpush1.bf16.msra.mxu0 %v1490
    %1515 = vmatprep.subr.bf16.mxu0 0
    %1516 = vmatpush1.bf16.msra.mxu0 0
    %1517 = vmatprep.subr.bf16.mxu0 0
    %1518 = vmatpush1.bf16.msra.mxu0 0
    %1519 = vmatprep.subr.bf16.mxu0 0
    %1520 = vmatpush1.bf16.msra.mxu0 0
    %1521 = vmatprep.subr.bf16.mxu0 0
    %1522 = vmatpush1.bf16.msra.mxu0 0
    %1523 = vmatprep.subr.bf16.mxu0 0
    %1524 = vmatpush1.bf16.msra.mxu0 0
    %1525 = vmatprep.subr.bf16.mxu0 0
    %1526 = vmatpush1.bf16.msra.mxu0 0
    %1527 = vmatprep.subr.bf16.mxu0 0
    %1528 = vmatpush1.bf16.msra.mxu0 0
    %1529 = vmatprep.subr.bf16.mxu0 0
    %1530 = vmatpush1.bf16.msra.mxu0 0
    %1531 = vmatprep.mubr.bf16.mxu0 0
    %1532 = vmatmul.mubr.bf16.gmra.mrb[0].mxu0 %v1427
    %v1533 = vpop.f32.mrb[0].mxu0
    %v1534 = vadd.f32 %v1449, %v1533
    %v1535 = vpop.f32.mrb[0].mxu0
    %v1536 = vpop.f32.mrb[0].mxu0
    %v1537 = vpop.f32.mrb[0].mxu0
    %1538 = vdwg.mxu0
    %v1539 = vmax.f32 %v1534, 0.0
    %v1540 = vld [vmem:[#allocation26] sm:$0x1]
    %v1542 = vlaneseq
    %v1543 = vshrl.u32 %v1542, 7
    %v1544 = vsub.s32 0, %v1543
    %v1545 = vrot.slane %v1540, %v1544
    %v1547 = vmul.f32 %v1539, %v1545
    %1548 = vadd.xlane.f32.xlu0 %v1547
    %v1549 = vpop.xlane.xlu0 %1548
    %v1550 = vld [vmem:[#allocation2] sm:$0x1]
    %v1552 = vlaneseq
    %v1553 = vshrl.u32 %v1552, 7
    %v1554 = vsub.s32 0, %v1553
    %v1555 = vrot.slane %v1550, %v1554
    %v1557 = vadd.f32 %v1549, %v1555
    %vm1558 = vcmask 7168
    %1559 = vst.msk [vmem:[#allocation27] sm:$0xff] %vm1558, %v1557
    // Predicated region
    $region126: #{tpu_custom_call.1} parent=1 // pred_check
      _
    $region127: #{tpu_custom_call.1} parent=1 // pred_check_branch
      %1561 = sbr.rel (0) target = $region129
    $region128: #{tpu_custom_call.1} parent=1 // pred_region
      %s1563 = ssub.s32 128, 128
      %1564 = vsyncadd [#allocation5], %s1563
      %s1566 = sshll.u32 [#allocation27], 4
      %s1567 = int_to_ptr.vmem [resolvable:$true] %s1566
      %1569 = dma.vmem_to_hbm [thread:$0]  %s1567, 128, %s16, [#allocation5]
    $region129: #{tpu_custom_call.1} parent=1 // pred_fallthru
      _
    // Predicated region
    $region130: #{tpu_custom_call.1} parent=1 // pred_check
      _
    $region131: #{tpu_custom_call.1} parent=1 // pred_check_branch
      %1571 = sbr.rel (0) target = $region133
    $region132: #{tpu_custom_call.1} parent=1 // pred_region
      %1572 = dma.done [#allocation5], 128
    $region133: #{tpu_custom_call.1} parent=1 // pred_fallthru
      _
    %1573 = vsyncpa [#allocation4], 1
    %1574 = vsyncpa [#allocation7], 1
    %1575 = vsyncpa [#allocation10], 1
    %1576 = vsyncpa [#allocation13], 1
    %1577 = vsyncpa [#allocation16], 1
    %1578 = vsyncpa [#allocation19], 1
    %1579 = vsyncpa [#allocation22], 1
    %1580 = vsyncpa [#allocation25], 1
    %1581 = vsyncpa [#allocation5], 1

</llo_original>
